<compile_context>
chip_gen: v7x
topology: tpu7x:2x2x1
jax: 0.10.0
libtpu: 0.0.40
codegen_flags: <defaults>
</compile_context>

<pallas_src>
import math

import jax
import jax.numpy as jnp
from jax import lax
from jax.experimental import pallas as pl
from jax.experimental.pallas import tpu as pltpu


# ----------------------------- config ------------------------------------- #
B = 2          # batch
T = 8          # sequence length (== block_size)
C = 32         # n_embd
NH = 4         # n_head
HD = C // NH   # head dim
CF = 4 * C     # MLP hidden
R = B * T      # total rows processed per kernel invocation


# ----------------------------- kernel ------------------------------------- #
def block_kernel(x_ref, pp_ref, w_attn_ref, w_cm_ref, w_fc_ref, out_ref):
    x = x_ref[...]                                   # (R, C) fp32
    pp = pp_ref[...]                                 # (8, 128) fp32 param slab

    ln1_g = pp[0, :C]
    ln1_b = pp[1, :C]
    ln2_g = pp[2, :C]
    ln2_b = pp[3, :C]
    b_attn = pp[4, :3 * C]
    b_cproj = pp[5, :C]
    b_fc = pp[6, :CF]
    b_mproj = pp[7, :C]

    eps = 1e-5

    def layernorm(h, g, b):
        mu = jnp.mean(h, axis=-1, keepdims=True)
        d = h - mu
        var = jnp.mean(d * d, axis=-1, keepdims=True)
        return d * lax.rsqrt(var + eps) * g + b

    # ---- attention branch -------------------------------------------------
    h = layernorm(x, ln1_g, ln1_b)                                  # (R, C) f32
    qkv = jnp.dot(h.astype(jnp.bfloat16), w_attn_ref[...],
                  preferred_element_type=jnp.float32) + b_attn      # (R, 3C)
    q = qkv[:, 0 * C:1 * C]
    k = qkv[:, 1 * C:2 * C]
    v = qkv[:, 2 * C:3 * C]

    # gather per-(batch, head) tiles into one merged batch axis (B*NH, T, HD)
    def split_heads(z):
        tiles = []
        for bi in range(B):
            zb = z[bi * T:(bi + 1) * T, :]                          # (T, C)
            for hh in range(NH):
                tiles.append(zb[:, hh * HD:(hh + 1) * HD])          # (T, HD)
        return jnp.stack(tiles, axis=0)                             # (B*NH,T,HD)

    qh = split_heads(q).astype(jnp.bfloat16)
    kh = split_heads(k).astype(jnp.bfloat16)
    vh = split_heads(v).astype(jnp.bfloat16)

    scale = 1.0 / math.sqrt(HD)
    att = jnp.einsum('nqd,nkd->nqk', qh, kh,
                     preferred_element_type=jnp.float32) * scale    # (BH, T, T)

    # additive causal bias, built once
    row = lax.broadcasted_iota(jnp.int32, (T, T), 0)
    col = lax.broadcasted_iota(jnp.int32, (T, T), 1)
    mask_bias = jnp.where(col <= row, jnp.float32(0.0), jnp.float32(-1e30))
    att = att + mask_bias[None, :, :]

    att = att - jnp.max(att, axis=-1, keepdims=True)
    e = jnp.exp(att)
    inv_den = pl.reciprocal(jnp.sum(e, axis=-1, keepdims=True), approx=True)
    p = e * inv_den                                                 # softmax

    yh = jnp.einsum('nqk,nkd->nqd', p.astype(jnp.bfloat16), vh,
                    preferred_element_type=jnp.float32)             # (BH, T, HD)

    # merge heads back: (B*NH, T, HD) -> (B*T, C)
    y = jnp.concatenate(
        [jnp.concatenate([yh[bi * NH + hh] for hh in range(NH)], axis=-1)
         for bi in range(B)], axis=0)                               # (R, C)

    w_cproj = w_cm_ref[:C, :]                                       # (C, C) bf16
    w_mproj = w_cm_ref[C:, :]                                       # (CF, C) bf16

    y = jnp.dot(y.astype(jnp.bfloat16), w_cproj,
                preferred_element_type=jnp.float32) + b_cproj
    x1 = x + y                                                      # residual 1

    # ---- MLP branch --------------------------------------------------------
    h2 = layernorm(x1, ln2_g, ln2_b)
    h2 = jnp.dot(h2.astype(jnp.bfloat16), w_fc_ref[...],
                 preferred_element_type=jnp.float32) + b_fc         # (R, 4C)
    # GELU (tanh approximation, as in GPT-2); explicit muls for the cube
    c0 = math.sqrt(2.0 / math.pi)
    h2 = 0.5 * h2 * (1.0 + jnp.tanh(c0 * (h2 + 0.044715 * (h2 * h2 * h2))))
    h2 = jnp.dot(h2.astype(jnp.bfloat16), w_mproj,
                 preferred_element_type=jnp.float32) + b_mproj
    out_ref[...] = x1 + h2                                          # residual 2


# ----------------------------- wrapper ------------------------------------ #
def block_forward(x, params):
    (ln1_g, ln1_b, ln2_g, ln2_b,
     w_attn, b_attn, w_cproj, b_cproj,
     w_fc, b_fc, w_mproj, b_mproj) = params

    x2d = x.reshape(R, C).astype(jnp.float32)

    # pack the 8 small 1-D params into one (8, 128) fp32 slab (1 vreg, 1 DMA)
    def pad128(v):
        return jnp.pad(v.astype(jnp.float32), (0, 128 - v.shape[0]))

    packed = jnp.stack([pad128(ln1_g), pad128(ln1_b),
                        pad128(ln2_g), pad128(ln2_b),
                        pad128(b_attn), pad128(b_cproj),
                        pad128(b_fc), pad128(b_mproj)], axis=0)     # (8, 128)

    # bf16 weights for the MXU (accumulation stays fp32 in-kernel)
    w_attn_bf = w_attn.astype(jnp.bfloat16)                         # (C, 3C)
    w_cm_bf = jnp.concatenate([w_cproj, w_mproj],
                              axis=0).astype(jnp.bfloat16)          # (C+CF, C)
    w_fc_bf = w_fc.astype(jnp.bfloat16)                             # (C, CF)

    def full(arr):
        nd = arr.ndim
        return pl.BlockSpec(arr.shape, lambda i, _n=nd: (0,) * _n)

    out2d = pl.pallas_call(
        block_kernel,
        out_shape=jax.ShapeDtypeStruct((R, C), jnp.float32),
        grid=(1,),
        in_specs=[full(x2d), full(packed), full(w_attn_bf),
                  full(w_cm_bf), full(w_fc_bf)],
        out_specs=pl.BlockSpec((R, C), lambda i: (0, 0)),
        compiler_params=pltpu.CompilerParams(
            dimension_semantics=("arbitrary",)),
        cost_estimate=pl.CostEstimate(flops=410_000,
                                      transcendentals=2_700,
                                      bytes_accessed=37_000),
    )(x2d, packed, w_attn_bf, w_cm_bf, w_fc_bf)
    return out2d.reshape(B, T, C)


# ----------------------------- reference (pure JAX, fp32) ------------------ #
def block_reference(x, params):
    (ln1_g, ln1_b, ln2_g, ln2_b,
     w_attn, b_attn, w_cproj, b_cproj,
     w_fc, b_fc, w_mproj, b_mproj) = params
    eps = 1e-5

    def ln(h, g, b):
        mu = jnp.mean(h, -1, keepdims=True)
        var = jnp.mean((h - mu) ** 2, -1, keepdims=True)
        return (h - mu) / jnp.sqrt(var + eps) * g + b

    h = ln(x, ln1_g, ln1_b)
    qkv = h @ w_attn + b_attn
    q, k, v = jnp.split(qkv, 3, axis=-1)
    q = q.reshape(B, T, NH, HD).transpose(0, 2, 1, 3)
    k = k.reshape(B, T, NH, HD).transpose(0, 2, 1, 3)
    v = v.reshape(B, T, NH, HD).transpose(0, 2, 1, 3)
    att = jnp.einsum("bhqd,bhkd->bhqk", q, k) / math.sqrt(HD)
    mask = jnp.tril(jnp.ones((T, T), bool))
    att = jnp.where(mask, att, -jnp.inf)
    att = jax.nn.softmax(att, axis=-1)
    y = jnp.einsum("bhqk,bhkd->bhqd", att, v)
    y = y.transpose(0, 2, 1, 3).reshape(B, T, C)
    y = y @ w_cproj + b_cproj
    x1 = x + y
    h2 = ln(x1, ln2_g, ln2_b)
    h2 = h2 @ w_fc + b_fc
    h2 = 0.5 * h2 * (1.0 + jnp.tanh(math.sqrt(2.0 / math.pi)
                                    * (h2 + 0.044715 * h2 ** 3)))
    h2 = h2 @ w_mproj + b_mproj
    return x1 + h2


# ----------------------------- main ---------------------------------------- #
if __name__ == "__main__":
    key = jax.random.PRNGKey(0)
    ks = jax.random.split(key, 10)

    # Deterministic synthetic parameters in the y = x @ W + b convention
    # (PyTorch Linear weights transposed). Non-zero biases exercise packing.
    params = (
        jnp.ones((C,), jnp.float32),                                  # ln1_g
        0.02 * jax.random.normal(ks[5], (C,), jnp.float32),           # ln1_b
        jnp.ones((C,), jnp.float32),                                  # ln2_g
        0.02 * jax.random.normal(ks[6], (C,), jnp.float32),           # ln2_b
        0.02 * jax.random.normal(ks[1], (C, 3 * C), jnp.float32),     # w_attn
        0.02 * jax.random.normal(ks[7], (3 * C,), jnp.float32),       # b_attn
        0.02 * jax.random.normal(ks[2], (C, C), jnp.float32),         # w_cproj
        0.02 * jax.random.normal(ks[8], (C,), jnp.float32),           # b_cproj
        0.02 * jax.random.normal(ks[3], (C, CF), jnp.float32),        # w_fc
        0.02 * jax.random.normal(ks[9], (CF,), jnp.float32),          # b_fc
        0.02 * jax.random.normal(ks[4], (CF, C), jnp.float32),        # w_mproj
        jnp.zeros((C,), jnp.float32),                                 # b_mproj
    )

    x = jax.random.normal(ks[0], (B, T, C), jnp.float32)

    out = block_forward(x, params)
    out = jax.block_until_ready(out)

    ref = block_reference(x, params)
    assert out.shape == (B, T, C)
    # bf16 matmul operands + approx reciprocal => slightly looser tolerance
    assert jnp.allclose(out, ref, atol=1e-2, rtol=1e-2), (
        float(jnp.max(jnp.abs(out - ref))))

    print("KERNEL_OK")
</pallas_src>

<mosaic_0001>
module attributes {stable_mosaic.version = 11 : i64} {
  func.func @block_kernel(%arg0: i32, %arg1: memref<16x32xf32, #tpu.memory_space<vmem>>, %arg2: memref<8x128xf32, #tpu.memory_space<vmem>>, %arg3: memref<32x96xbf16, #tpu.memory_space<vmem>>, %arg4: memref<160x32xbf16, #tpu.memory_space<vmem>>, %arg5: memref<32x128xbf16, #tpu.memory_space<vmem>>, %arg6: memref<16x32xf32, #tpu.memory_space<vmem>>) attributes {dimension_semantics = [#tpu.dimension_semantics<arbitrary>], iteration_bounds = array<i64: 1>, scalar_prefetch = 0 : i64, scratch_operands = 0 : i64, tpu.core_type = #tpu.core_type<tc>, window_params = [{pipeline_mode = #tpu.pipeline_mode<synchronous>, transform_indices = @transform_0, window_bounds = array<i64: 16, 32>}, {pipeline_mode = #tpu.pipeline_mode<synchronous>, transform_indices = @transform_1, window_bounds = array<i64: 8, 128>}, {pipeline_mode = #tpu.pipeline_mode<synchronous>, transform_indices = @transform_2, window_bounds = array<i64: 32, 96>}, {pipeline_mode = #tpu.pipeline_mode<synchronous>, transform_indices = @transform_3, window_bounds = array<i64: 160, 32>}, {pipeline_mode = #tpu.pipeline_mode<synchronous>, transform_indices = @transform_4, window_bounds = array<i64: 32, 128>}, {pipeline_mode = #tpu.pipeline_mode<synchronous>, transform_indices = @transform_5, window_bounds = array<i64: 16, 32>}]} {
    %c0 = arith.constant 0 : index
    %c0_0 = arith.constant 0 : index
    %0 = vector.load %arg1[%c0, %c0_0] : memref<16x32xf32, #tpu.memory_space<vmem>>, vector<16x32xf32>
    %c0_1 = arith.constant 0 : index
    %c0_2 = arith.constant 0 : index
    %1 = vector.load %arg2[%c0_1, %c0_2] : memref<8x128xf32, #tpu.memory_space<vmem>>, vector<8x128xf32>
    %2 = vector.extract_strided_slice %1 {offsets = [0, 0], sizes = [1, 32], strides = [1, 1]} : vector<8x128xf32> to vector<1x32xf32>
    %3 = vector.shape_cast %2 : vector<1x32xf32> to vector<32xf32>
    %4 = vector.extract_strided_slice %1 {offsets = [1, 0], sizes = [1, 32], strides = [1, 1]} : vector<8x128xf32> to vector<1x32xf32>
    %5 = vector.shape_cast %4 : vector<1x32xf32> to vector<32xf32>
    %6 = vector.extract_strided_slice %1 {offsets = [2, 0], sizes = [1, 32], strides = [1, 1]} : vector<8x128xf32> to vector<1x32xf32>
    %7 = vector.shape_cast %6 : vector<1x32xf32> to vector<32xf32>
    %8 = vector.extract_strided_slice %1 {offsets = [3, 0], sizes = [1, 32], strides = [1, 1]} : vector<8x128xf32> to vector<1x32xf32>
    %9 = vector.shape_cast %8 : vector<1x32xf32> to vector<32xf32>
    %10 = vector.extract_strided_slice %1 {offsets = [4, 0], sizes = [1, 96], strides = [1, 1]} : vector<8x128xf32> to vector<1x96xf32>
    %11 = vector.shape_cast %10 : vector<1x96xf32> to vector<96xf32>
    %12 = vector.extract_strided_slice %1 {offsets = [5, 0], sizes = [1, 32], strides = [1, 1]} : vector<8x128xf32> to vector<1x32xf32>
    %13 = vector.shape_cast %12 : vector<1x32xf32> to vector<32xf32>
    %14 = vector.extract_strided_slice %1 {offsets = [6, 0], sizes = [1, 128], strides = [1, 1]} : vector<8x128xf32> to vector<1x128xf32>
    %15 = vector.shape_cast %14 : vector<1x128xf32> to vector<128xf32>
    %16 = vector.extract_strided_slice %1 {offsets = [7, 0], sizes = [1, 32], strides = [1, 1]} : vector<8x128xf32> to vector<1x32xf32>
    %17 = vector.shape_cast %16 : vector<1x32xf32> to vector<32xf32>
    %cst = arith.constant dense<0.000000e+00> : vector<16xf32>
    %18 = vector.multi_reduction <add>, %0, %cst [1] : vector<16x32xf32> to vector<16xf32>
    %19 = vector.shape_cast %18 : vector<16xf32> to vector<16x1xf32>
    %cst_3 = arith.constant 3.200000e+01 : f32
    %20 = vector.broadcast %cst_3 : f32 to vector<16x1xf32>
    %21 = arith.divf %19, %20 : vector<16x1xf32>
    %22 = vector.broadcast %21 : vector<16x1xf32> to vector<16x32xf32>
    %23 = arith.subf %0, %22 : vector<16x32xf32>
    %24 = arith.mulf %23, %23 : vector<16x32xf32>
    %cst_4 = arith.constant dense<0.000000e+00> : vector<16xf32>
    %25 = vector.multi_reduction <add>, %24, %cst_4 [1] : vector<16x32xf32> to vector<16xf32>
    %26 = vector.shape_cast %25 : vector<16xf32> to vector<16x1xf32>
    %cst_5 = arith.constant 3.200000e+01 : f32
    %27 = vector.broadcast %cst_5 : f32 to vector<16x1xf32>
    %28 = arith.divf %26, %27 : vector<16x1xf32>
    %cst_6 = arith.constant 9.99999974E-6 : f32
    %29 = vector.broadcast %cst_6 : f32 to vector<16x1xf32>
    %30 = arith.addf %28, %29 : vector<16x1xf32>
    %31 = math.rsqrt %30 : vector<16x1xf32>
    %32 = vector.broadcast %31 : vector<16x1xf32> to vector<16x32xf32>
    %33 = arith.mulf %23, %32 : vector<16x32xf32>
    %34 = vector.shape_cast %3 : vector<32xf32> to vector<1x32xf32>
    %35 = vector.broadcast %34 : vector<1x32xf32> to vector<16x32xf32>
    %36 = arith.mulf %33, %35 : vector<16x32xf32>
    %37 = vector.shape_cast %5 : vector<32xf32> to vector<1x32xf32>
    %38 = vector.broadcast %37 : vector<1x32xf32> to vector<16x32xf32>
    %39 = arith.addf %36, %38 : vector<16x32xf32>
    %40 = arith.truncf %39 : vector<16x32xf32> to vector<16x32xbf16>
    %c0_7 = arith.constant 0 : index
    %c0_8 = arith.constant 0 : index
    %41 = vector.load %arg3[%c0_7, %c0_8] : memref<32x96xbf16, #tpu.memory_space<vmem>>, vector<32x96xbf16>
    %cst_9 = arith.constant dense<0.000000e+00> : vector<16x96xf32>
    %42 = tpu.matmul %40, %41, %cst_9 {dimension_numbers = #tpu.dot_dimension_numbers<[1], [0], [0], [1], [0, 0, 1, 1], [], []>} : vector<16x32xbf16>, vector<32x96xbf16>, vector<16x96xf32> -> vector<16x96xf32>
    %43 = vector.shape_cast %11 : vector<96xf32> to vector<1x96xf32>
    %44 = vector.broadcast %43 : vector<1x96xf32> to vector<16x96xf32>
    %45 = arith.addf %42, %44 : vector<16x96xf32>
    %46 = vector.extract_strided_slice %45 {offsets = [0, 0], sizes = [16, 32], strides = [1, 1]} : vector<16x96xf32> to vector<16x32xf32>
    %47 = vector.extract_strided_slice %45 {offsets = [0, 32], sizes = [16, 32], strides = [1, 1]} : vector<16x96xf32> to vector<16x32xf32>
    %48 = vector.extract_strided_slice %45 {offsets = [0, 64], sizes = [16, 32], strides = [1, 1]} : vector<16x96xf32> to vector<16x32xf32>
    %49 = vector.extract_strided_slice %46 {offsets = [0, 0], sizes = [8, 32], strides = [1, 1]} : vector<16x32xf32> to vector<8x32xf32>
    %50 = vector.extract_strided_slice %49 {offsets = [0, 0], sizes = [8, 8], strides = [1, 1]} : vector<8x32xf32> to vector<8x8xf32>
    %51 = vector.extract_strided_slice %49 {offsets = [0, 8], sizes = [8, 8], strides = [1, 1]} : vector<8x32xf32> to vector<8x8xf32>
    %52 = vector.extract_strided_slice %49 {offsets = [0, 16], sizes = [8, 8], strides = [1, 1]} : vector<8x32xf32> to vector<8x8xf32>
    %53 = vector.extract_strided_slice %49 {offsets = [0, 24], sizes = [8, 8], strides = [1, 1]} : vector<8x32xf32> to vector<8x8xf32>
    %54 = vector.extract_strided_slice %46 {offsets = [8, 0], sizes = [8, 32], strides = [1, 1]} : vector<16x32xf32> to vector<8x32xf32>
    %55 = vector.extract_strided_slice %54 {offsets = [0, 0], sizes = [8, 8], strides = [1, 1]} : vector<8x32xf32> to vector<8x8xf32>
    %56 = vector.extract_strided_slice %54 {offsets = [0, 8], sizes = [8, 8], strides = [1, 1]} : vector<8x32xf32> to vector<8x8xf32>
    %57 = vector.extract_strided_slice %54 {offsets = [0, 16], sizes = [8, 8], strides = [1, 1]} : vector<8x32xf32> to vector<8x8xf32>
    %58 = vector.extract_strided_slice %54 {offsets = [0, 24], sizes = [8, 8], strides = [1, 1]} : vector<8x32xf32> to vector<8x8xf32>
    %59 = vector.shape_cast %50 : vector<8x8xf32> to vector<1x8x8xf32>
    %60 = vector.shape_cast %51 : vector<8x8xf32> to vector<1x8x8xf32>
    %61 = vector.shape_cast %52 : vector<8x8xf32> to vector<1x8x8xf32>
    %62 = vector.shape_cast %53 : vector<8x8xf32> to vector<1x8x8xf32>
    %63 = vector.shape_cast %55 : vector<8x8xf32> to vector<1x8x8xf32>
    %64 = vector.shape_cast %56 : vector<8x8xf32> to vector<1x8x8xf32>
    %65 = vector.shape_cast %57 : vector<8x8xf32> to vector<1x8x8xf32>
    %66 = vector.shape_cast %58 : vector<8x8xf32> to vector<1x8x8xf32>
    %67 = tpu.concatenate %59, %60, %61, %62, %63, %64, %65, %66 in 0 : vector<1x8x8xf32>, vector<1x8x8xf32>, vector<1x8x8xf32>, vector<1x8x8xf32>, vector<1x8x8xf32>, vector<1x8x8xf32>, vector<1x8x8xf32>, vector<1x8x8xf32> -> vector<8x8x8xf32>
    %68 = arith.truncf %67 : vector<8x8x8xf32> to vector<8x8x8xbf16>
    %69 = vector.extract_strided_slice %47 {offsets = [0, 0], sizes = [8, 32], strides = [1, 1]} : vector<16x32xf32> to vector<8x32xf32>
    %70 = vector.extract_strided_slice %69 {offsets = [0, 0], sizes = [8, 8], strides = [1, 1]} : vector<8x32xf32> to vector<8x8xf32>
    %71 = vector.extract_strided_slice %69 {offsets = [0, 8], sizes = [8, 8], strides = [1, 1]} : vector<8x32xf32> to vector<8x8xf32>
    %72 = vector.extract_strided_slice %69 {offsets = [0, 16], sizes = [8, 8], strides = [1, 1]} : vector<8x32xf32> to vector<8x8xf32>
    %73 = vector.extract_strided_slice %69 {offsets = [0, 24], sizes = [8, 8], strides = [1, 1]} : vector<8x32xf32> to vector<8x8xf32>
    %74 = vector.extract_strided_slice %47 {offsets = [8, 0], sizes = [8, 32], strides = [1, 1]} : vector<16x32xf32> to vector<8x32xf32>
    %75 = vector.extract_strided_slice %74 {offsets = [0, 0], sizes = [8, 8], strides = [1, 1]} : vector<8x32xf32> to vector<8x8xf32>
    %76 = vector.extract_strided_slice %74 {offsets = [0, 8], sizes = [8, 8], strides = [1, 1]} : vector<8x32xf32> to vector<8x8xf32>
    %77 = vector.extract_strided_slice %74 {offsets = [0, 16], sizes = [8, 8], strides = [1, 1]} : vector<8x32xf32> to vector<8x8xf32>
    %78 = vector.extract_strided_slice %74 {offsets = [0, 24], sizes = [8, 8], strides = [1, 1]} : vector<8x32xf32> to vector<8x8xf32>
    %79 = vector.shape_cast %70 : vector<8x8xf32> to vector<1x8x8xf32>
    %80 = vector.shape_cast %71 : vector<8x8xf32> to vector<1x8x8xf32>
    %81 = vector.shape_cast %72 : vector<8x8xf32> to vector<1x8x8xf32>
    %82 = vector.shape_cast %73 : vector<8x8xf32> to vector<1x8x8xf32>
    %83 = vector.shape_cast %75 : vector<8x8xf32> to vector<1x8x8xf32>
    %84 = vector.shape_cast %76 : vector<8x8xf32> to vector<1x8x8xf32>
    %85 = vector.shape_cast %77 : vector<8x8xf32> to vector<1x8x8xf32>
    %86 = vector.shape_cast %78 : vector<8x8xf32> to vector<1x8x8xf32>
    %87 = tpu.concatenate %79, %80, %81, %82, %83, %84, %85, %86 in 0 : vector<1x8x8xf32>, vector<1x8x8xf32>, vector<1x8x8xf32>, vector<1x8x8xf32>, vector<1x8x8xf32>, vector<1x8x8xf32>, vector<1x8x8xf32>, vector<1x8x8xf32> -> vector<8x8x8xf32>
    %88 = arith.truncf %87 : vector<8x8x8xf32> to vector<8x8x8xbf16>
    %89 = vector.extract_strided_slice %48 {offsets = [0, 0], sizes = [8, 32], strides = [1, 1]} : vector<16x32xf32> to vector<8x32xf32>
    %90 = vector.extract_strided_slice %89 {offsets = [0, 0], sizes = [8, 8], strides = [1, 1]} : vector<8x32xf32> to vector<8x8xf32>
    %91 = vector.extract_strided_slice %89 {offsets = [0, 8], sizes = [8, 8], strides = [1, 1]} : vector<8x32xf32> to vector<8x8xf32>
    %92 = vector.extract_strided_slice %89 {offsets = [0, 16], sizes = [8, 8], strides = [1, 1]} : vector<8x32xf32> to vector<8x8xf32>
    %93 = vector.extract_strided_slice %89 {offsets = [0, 24], sizes = [8, 8], strides = [1, 1]} : vector<8x32xf32> to vector<8x8xf32>
    %94 = vector.extract_strided_slice %48 {offsets = [8, 0], sizes = [8, 32], strides = [1, 1]} : vector<16x32xf32> to vector<8x32xf32>
    %95 = vector.extract_strided_slice %94 {offsets = [0, 0], sizes = [8, 8], strides = [1, 1]} : vector<8x32xf32> to vector<8x8xf32>
    %96 = vector.extract_strided_slice %94 {offsets = [0, 8], sizes = [8, 8], strides = [1, 1]} : vector<8x32xf32> to vector<8x8xf32>
    %97 = vector.extract_strided_slice %94 {offsets = [0, 16], sizes = [8, 8], strides = [1, 1]} : vector<8x32xf32> to vector<8x8xf32>
    %98 = vector.extract_strided_slice %94 {offsets = [0, 24], sizes = [8, 8], strides = [1, 1]} : vector<8x32xf32> to vector<8x8xf32>
    %99 = vector.shape_cast %90 : vector<8x8xf32> to vector<1x8x8xf32>
    %100 = vector.shape_cast %91 : vector<8x8xf32> to vector<1x8x8xf32>
    %101 = vector.shape_cast %92 : vector<8x8xf32> to vector<1x8x8xf32>
    %102 = vector.shape_cast %93 : vector<8x8xf32> to vector<1x8x8xf32>
    %103 = vector.shape_cast %95 : vector<8x8xf32> to vector<1x8x8xf32>
    %104 = vector.shape_cast %96 : vector<8x8xf32> to vector<1x8x8xf32>
    %105 = vector.shape_cast %97 : vector<8x8xf32> to vector<1x8x8xf32>
    %106 = vector.shape_cast %98 : vector<8x8xf32> to vector<1x8x8xf32>
    %107 = tpu.concatenate %99, %100, %101, %102, %103, %104, %105, %106 in 0 : vector<1x8x8xf32>, vector<1x8x8xf32>, vector<1x8x8xf32>, vector<1x8x8xf32>, vector<1x8x8xf32>, vector<1x8x8xf32>, vector<1x8x8xf32>, vector<1x8x8xf32> -> vector<8x8x8xf32>
    %108 = arith.truncf %107 : vector<8x8x8xf32> to vector<8x8x8xbf16>
    "tpu.trace_start"() <{level = 10 : i32, message = "nqd,nkd->nqk"}> : () -> ()
    %cst_10 = arith.constant dense<0.000000e+00> : vector<8x8x8xf32>
    %109 = tpu.matmul %68, %88, %cst_10 {dimension_numbers = #tpu.dot_dimension_numbers<[2], [2], [1], [1], [0, 0, 0, 1, 1, 1], [0], [0]>} : vector<8x8x8xbf16>, vector<8x8x8xbf16>, vector<8x8x8xf32> -> vector<8x8x8xf32>
    "tpu.trace_stop"() : () -> ()
    %cst_11 = arith.constant 0.353553385 : f32
    %110 = vector.broadcast %cst_11 : f32 to vector<8x8x8xf32>
    %111 = arith.mulf %109, %110 : vector<8x8x8xf32>
    %112 = tpu.iota {dimensions = array<i32: 0>} : vector<8x8xi32>
    %113 = tpu.iota {dimensions = array<i32: 1>} : vector<8x8xi32>
    %114 = arith.cmpi sle, %113, %112 : vector<8x8xi32>
    %cst_12 = arith.constant 0.000000e+00 : f32
    %cst_13 = arith.constant -1.000000e+30 : f32
    %115 = vector.broadcast %cst_12 : f32 to vector<8x8xf32>
    %116 = vector.broadcast %cst_13 : f32 to vector<8x8xf32>
    %117 = arith.select %114, %115, %116 : vector<8x8xi1>, vector<8x8xf32>
    %118 = vector.shape_cast %117 : vector<8x8xf32> to vector<1x8x8xf32>
    %119 = vector.broadcast %118 : vector<1x8x8xf32> to vector<8x8x8xf32>
    %120 = arith.addf %111, %119 : vector<8x8x8xf32>
    %cst_14 = arith.constant dense<0xFF800000> : vector<8x8xf32>
    %121 = vector.multi_reduction <maximumf>, %120, %cst_14 [2] : vector<8x8x8xf32> to vector<8x8xf32>
    %122 = vector.shape_cast %121 : vector<8x8xf32> to vector<8x8x1xf32>
    %123 = vector.broadcast %122 : vector<8x8x1xf32> to vector<8x8x8xf32>
    %124 = arith.subf %120, %123 : vector<8x8x8xf32>
    %125 = math.exp %124 : vector<8x8x8xf32>
    %cst_15 = arith.constant dense<0.000000e+00> : vector<8x8xf32>
    %126 = vector.multi_reduction <add>, %125, %cst_15 [2] : vector<8x8x8xf32> to vector<8x8xf32>
    %127 = vector.shape_cast %126 : vector<8x8xf32> to vector<8x8x1xf32>
    %128 = tpu.reciprocal %127 {approx = true} : vector<8x8x1xf32> -> vector<8x8x1xf32>
    %129 = vector.broadcast %128 : vector<8x8x1xf32> to vector<8x8x8xf32>
    %130 = arith.mulf %125, %129 : vector<8x8x8xf32>
    %131 = arith.truncf %130 : vector<8x8x8xf32> to vector<8x8x8xbf16>
    "tpu.trace_start"() <{level = 10 : i32, message = "nqk,nkd->nqd"}> : () -> ()
    %cst_16 = arith.constant dense<0.000000e+00> : vector<8x8x8xf32>
    %132 = tpu.matmul %131, %108, %cst_16 {dimension_numbers = #tpu.dot_dimension_numbers<[2], [1], [1], [2], [0, 0, 0, 1, 1, 2], [0], [0]>} : vector<8x8x8xbf16>, vector<8x8x8xbf16>, vector<8x8x8xf32> -> vector<8x8x8xf32>
    "tpu.trace_stop"() : () -> ()
    %133 = vector.extract_strided_slice %132 {offsets = [0, 0, 0], sizes = [1, 8, 8], strides = [1, 1, 1]} : vector<8x8x8xf32> to vector<1x8x8xf32>
    %134 = vector.shape_cast %133 : vector<1x8x8xf32> to vector<8x8xf32>
    %135 = vector.extract_strided_slice %132 {offsets = [1, 0, 0], sizes = [1, 8, 8], strides = [1, 1, 1]} : vector<8x8x8xf32> to vector<1x8x8xf32>
    %136 = vector.shape_cast %135 : vector<1x8x8xf32> to vector<8x8xf32>
    %137 = vector.extract_strided_slice %132 {offsets = [2, 0, 0], sizes = [1, 8, 8], strides = [1, 1, 1]} : vector<8x8x8xf32> to vector<1x8x8xf32>
    %138 = vector.shape_cast %137 : vector<1x8x8xf32> to vector<8x8xf32>
    %139 = vector.extract_strided_slice %132 {offsets = [3, 0, 0], sizes = [1, 8, 8], strides = [1, 1, 1]} : vector<8x8x8xf32> to vector<1x8x8xf32>
    %140 = vector.shape_cast %139 : vector<1x8x8xf32> to vector<8x8xf32>
    %141 = tpu.concatenate %134, %136, %138, %140 in 1 : vector<8x8xf32>, vector<8x8xf32>, vector<8x8xf32>, vector<8x8xf32> -> vector<8x32xf32>
    %142 = vector.extract_strided_slice %132 {offsets = [4, 0, 0], sizes = [1, 8, 8], strides = [1, 1, 1]} : vector<8x8x8xf32> to vector<1x8x8xf32>
    %143 = vector.shape_cast %142 : vector<1x8x8xf32> to vector<8x8xf32>
    %144 = vector.extract_strided_slice %132 {offsets = [5, 0, 0], sizes = [1, 8, 8], strides = [1, 1, 1]} : vector<8x8x8xf32> to vector<1x8x8xf32>
    %145 = vector.shape_cast %144 : vector<1x8x8xf32> to vector<8x8xf32>
    %146 = vector.extract_strided_slice %132 {offsets = [6, 0, 0], sizes = [1, 8, 8], strides = [1, 1, 1]} : vector<8x8x8xf32> to vector<1x8x8xf32>
    %147 = vector.shape_cast %146 : vector<1x8x8xf32> to vector<8x8xf32>
    %148 = vector.extract_strided_slice %132 {offsets = [7, 0, 0], sizes = [1, 8, 8], strides = [1, 1, 1]} : vector<8x8x8xf32> to vector<1x8x8xf32>
    %149 = vector.shape_cast %148 : vector<1x8x8xf32> to vector<8x8xf32>
    %150 = tpu.concatenate %143, %145, %147, %149 in 1 : vector<8x8xf32>, vector<8x8xf32>, vector<8x8xf32>, vector<8x8xf32> -> vector<8x32xf32>
    %151 = tpu.concatenate %141, %150 in 0 : vector<8x32xf32>, vector<8x32xf32> -> vector<16x32xf32>
    %c0_17 = arith.constant 0 : index
    %c0_18 = arith.constant 0 : index
    %152 = vector.load %arg4[%c0_17, %c0_18] : memref<160x32xbf16, #tpu.memory_space<vmem>>, vector<32x32xbf16>
    %c32 = arith.constant 32 : index
    %c0_19 = arith.constant 0 : index
    %153 = vector.load %arg4[%c32, %c0_19] : memref<160x32xbf16, #tpu.memory_space<vmem>>, vector<128x32xbf16>
    %154 = arith.truncf %151 : vector<16x32xf32> to vector<16x32xbf16>
    %cst_20 = arith.constant dense<0.000000e+00> : vector<16x32xf32>
    %155 = tpu.matmul %154, %152, %cst_20 {dimension_numbers = #tpu.dot_dimension_numbers<[1], [0], [0], [1], [0, 0, 1, 1], [], []>} : vector<16x32xbf16>, vector<32x32xbf16>, vector<16x32xf32> -> vector<16x32xf32>
    %156 = vector.shape_cast %13 : vector<32xf32> to vector<1x32xf32>
    %157 = vector.broadcast %156 : vector<1x32xf32> to vector<16x32xf32>
    %158 = arith.addf %155, %157 : vector<16x32xf32>
    %159 = arith.addf %0, %158 : vector<16x32xf32>
    %cst_21 = arith.constant dense<0.000000e+00> : vector<16xf32>
    %160 = vector.multi_reduction <add>, %159, %cst_21 [1] : vector<16x32xf32> to vector<16xf32>
    %161 = vector.shape_cast %160 : vector<16xf32> to vector<16x1xf32>
    %cst_22 = arith.constant 3.200000e+01 : f32
    %162 = vector.broadcast %cst_22 : f32 to vector<16x1xf32>
    %163 = arith.divf %161, %162 : vector<16x1xf32>
    %164 = vector.broadcast %163 : vector<16x1xf32> to vector<16x32xf32>
    %165 = arith.subf %159, %164 : vector<16x32xf32>
    %166 = arith.mulf %165, %165 : vector<16x32xf32>
    %cst_23 = arith.constant dense<0.000000e+00> : vector<16xf32>
    %167 = vector.multi_reduction <add>, %166, %cst_23 [1] : vector<16x32xf32> to vector<16xf32>
    %168 = vector.shape_cast %167 : vector<16xf32> to vector<16x1xf32>
    %cst_24 = arith.constant 3.200000e+01 : f32
    %169 = vector.broadcast %cst_24 : f32 to vector<16x1xf32>
    %170 = arith.divf %168, %169 : vector<16x1xf32>
    %cst_25 = arith.constant 9.99999974E-6 : f32
    %171 = vector.broadcast %cst_25 : f32 to vector<16x1xf32>
    %172 = arith.addf %170, %171 : vector<16x1xf32>
    %173 = math.rsqrt %172 : vector<16x1xf32>
    %174 = vector.broadcast %173 : vector<16x1xf32> to vector<16x32xf32>
    %175 = arith.mulf %165, %174 : vector<16x32xf32>
    %176 = vector.shape_cast %7 : vector<32xf32> to vector<1x32xf32>
    %177 = vector.broadcast %176 : vector<1x32xf32> to vector<16x32xf32>
    %178 = arith.mulf %175, %177 : vector<16x32xf32>
    %179 = vector.shape_cast %9 : vector<32xf32> to vector<1x32xf32>
    %180 = vector.broadcast %179 : vector<1x32xf32> to vector<16x32xf32>
    %181 = arith.addf %178, %180 : vector<16x32xf32>
    %182 = arith.truncf %181 : vector<16x32xf32> to vector<16x32xbf16>
    %c0_26 = arith.constant 0 : index
    %c0_27 = arith.constant 0 : index
    %183 = vector.load %arg5[%c0_26, %c0_27] : memref<32x128xbf16, #tpu.memory_space<vmem>>, vector<32x128xbf16>
    %cst_28 = arith.constant dense<0.000000e+00> : vector<16x128xf32>
    %184 = tpu.matmul %182, %183, %cst_28 {dimension_numbers = #tpu.dot_dimension_numbers<[1], [0], [0], [1], [0, 0, 1, 1], [], []>} : vector<16x32xbf16>, vector<32x128xbf16>, vector<16x128xf32> -> vector<16x128xf32>
    %185 = vector.shape_cast %15 : vector<128xf32> to vector<1x128xf32>
    %186 = vector.broadcast %185 : vector<1x128xf32> to vector<16x128xf32>
    %187 = arith.addf %184, %186 : vector<16x128xf32>
    %cst_29 = arith.constant 5.000000e-01 : f32
    %188 = vector.broadcast %cst_29 : f32 to vector<16x128xf32>
    %189 = arith.mulf %188, %187 : vector<16x128xf32>
    %190 = arith.mulf %187, %187 : vector<16x128xf32>
    %191 = arith.mulf %190, %187 : vector<16x128xf32>
    %cst_30 = arith.constant 4.471500e-02 : f32
    %192 = vector.broadcast %cst_30 : f32 to vector<16x128xf32>
    %193 = arith.mulf %192, %191 : vector<16x128xf32>
    %194 = arith.addf %187, %193 : vector<16x128xf32>
    %cst_31 = arith.constant 0.797884583 : f32
    %195 = vector.broadcast %cst_31 : f32 to vector<16x128xf32>
    %196 = arith.mulf %195, %194 : vector<16x128xf32>
    %197 = math.tanh %196 : vector<16x128xf32>
    %cst_32 = arith.constant 1.000000e+00 : f32
    %198 = vector.broadcast %cst_32 : f32 to vector<16x128xf32>
    %199 = arith.addf %198, %197 : vector<16x128xf32>
    %200 = arith.mulf %189, %199 : vector<16x128xf32>
    %201 = arith.truncf %200 : vector<16x128xf32> to vector<16x128xbf16>
    %cst_33 = arith.constant dense<0.000000e+00> : vector<16x32xf32>
    %202 = tpu.matmul %201, %153, %cst_33 {dimension_numbers = #tpu.dot_dimension_numbers<[1], [0], [0], [1], [0, 0, 1, 1], [], []>} : vector<16x128xbf16>, vector<128x32xbf16>, vector<16x32xf32> -> vector<16x32xf32>
    %203 = vector.shape_cast %17 : vector<32xf32> to vector<1x32xf32>
    %204 = vector.broadcast %203 : vector<1x32xf32> to vector<16x32xf32>
    %205 = arith.addf %202, %204 : vector<16x32xf32>
    %206 = arith.addf %159, %205 : vector<16x32xf32>
    %c0_34 = arith.constant 0 : index
    %c0_35 = arith.constant 0 : index
    %207 = vector.load %arg6[%c0_34, %c0_35] : memref<16x32xf32, #tpu.memory_space<vmem>>, vector<16x32xf32>
    tpu.vector_store %arg6[%c0_34, %c0_35], %206 {strides = array<i32>} : memref<16x32xf32, #tpu.memory_space<vmem>>, vector<16x32xf32>,
    return
  }
  func.func @transform_0(%arg0: i32) -> (i32, i32) {
    %c0_i32 = arith.constant 0 : i32
    %c0_i32_0 = arith.constant 0 : i32
    %c0_i32_1 = arith.constant 0 : i32
    return %c0_i32, %c0_i32_0 : i32, i32
  }
  func.func @transform_1(%arg0: i32) -> (i32, i32) {
    %c0_i32 = arith.constant 0 : i32
    %c0_i32_0 = arith.constant 0 : i32
    %c0_i32_1 = arith.constant 0 : i32
    return %c0_i32, %c0_i32_0 : i32, i32
  }
  func.func @transform_2(%arg0: i32) -> (i32, i32) {
    %c0_i32 = arith.constant 0 : i32
    %c0_i32_0 = arith.constant 0 : i32
    %c0_i32_1 = arith.constant 0 : i32
    return %c0_i32, %c0_i32_0 : i32, i32
  }
  func.func @transform_3(%arg0: i32) -> (i32, i32) {
    %c0_i32 = arith.constant 0 : i32
    %c0_i32_0 = arith.constant 0 : i32
    %c0_i32_1 = arith.constant 0 : i32
    return %c0_i32, %c0_i32_0 : i32, i32
  }
  func.func @transform_4(%arg0: i32) -> (i32, i32) {
    %c0_i32 = arith.constant 0 : i32
    %c0_i32_0 = arith.constant 0 : i32
    %c0_i32_1 = arith.constant 0 : i32
    return %c0_i32, %c0_i32_0 : i32, i32
  }
  func.func @transform_5(%arg0: i32) -> (i32, i32) {
    %c0_i32 = arith.constant 0 : i32
    %c0_i32_0 = arith.constant 0 : i32
    %c0_i32_1 = arith.constant 0 : i32
    return %c0_i32, %c0_i32_0 : i32, i32
  }
}

</mosaic_0001>

<llo_original>
// kernel: tpu_custom_call.1
$region0: #{tpu_custom_call.1}
  #allocation0 [shape = 'u32[]', space=smem, size = 0x4, offset = 0x4, fixed_abs, tag = 'smem constant byte address 0x4 - core index']
  #allocation1 [shape = 'u32[144,128]{1,0:T(1,128)}', space=vmem, size = 0x12000, scoped, tag = 'internal scratch']
  %s0 = inlined_call_operand.vmem [shape: f32[16,32], index: 0, kind: input, shape index: {}]
  %s1 = inlined_call_operand.vmem [shape: f32[8,128], index: 1, kind: input, shape index: {}]
  %s2 = inlined_call_operand.vmem [shape: bf16[32,96], index: 2, kind: input, shape index: {}]
  %s3 = inlined_call_operand.vmem [shape: bf16[160,32], index: 3, kind: input, shape index: {}]
  %s4 = inlined_call_operand.vmem [shape: bf16[32,128], index: 4, kind: input, shape index: {}]
  %s5 = inlined_call_operand.hbm [shape: f32[16,32], index: 5, kind: output, shape index: {}]
  %s6 = sld [smem:[#allocation0]]
  $region30: #{tpu_custom_call.1} parent=0
    _
  %s8 = ssub.s32 1, %s6
  %s9 = scalar_select 0, %s8, %s6
  $region1: #{tpu_custom_call.1} parent=0
    #allocation2 [shape = 'u8[8192]{0}', space=vmem, size = 0x2000, scoped, tag = 'output window, operand 0, single buffered']
    #allocation3 [shape = 's32[1]{0}', space=sflag, size = 0x4, scoped, tag = 'scoped memory for tpu_custom_call.1']
    %10 = vsyncpa [#allocation3], 0
    // Predicated region
    $region2: #{tpu_custom_call.1} parent=1 // pred_check
      _
    $region3: #{tpu_custom_call.1} parent=1 // pred_check_branch
      %12 = sbr.rel (0) target = $region5
    $region4: #{tpu_custom_call.1} parent=1 // pred_region
      _
    $region5: #{tpu_custom_call.1} parent=1 // pred_fallthru
      _
    // Predicated region
    $region6: #{tpu_custom_call.1} parent=1 // pred_check
      _
    $region7: #{tpu_custom_call.1} parent=1 // pred_check_branch
      %14 = sbr.rel (0) target = $region9
    $region8: #{tpu_custom_call.1} parent=1 // pred_region
      _
    $region9: #{tpu_custom_call.1} parent=1 // pred_fallthru
      _
    // Predicated region
    $region10: #{tpu_custom_call.1} parent=1 // pred_check
      _
    $region11: #{tpu_custom_call.1} parent=1 // pred_check_branch
      %16 = sbr.rel (0) target = $region13
    $region12: #{tpu_custom_call.1} parent=1 // pred_region
      _
    $region13: #{tpu_custom_call.1} parent=1 // pred_fallthru
      _
    // Predicated region
    $region14: #{tpu_custom_call.1} parent=1 // pred_check
      _
    $region15: #{tpu_custom_call.1} parent=1 // pred_check_branch
      %18 = sbr.rel (0) target = $region17
    $region16: #{tpu_custom_call.1} parent=1 // pred_region
      _
    $region17: #{tpu_custom_call.1} parent=1 // pred_fallthru
      _
    // Predicated region
    $region18: #{tpu_custom_call.1} parent=1 // pred_check
      _
    $region19: #{tpu_custom_call.1} parent=1 // pred_check_branch
      %20 = sbr.rel (0) target = $region21
    $region20: #{tpu_custom_call.1} parent=1 // pred_region
      _
    $region21: #{tpu_custom_call.1} parent=1 // pred_fallthru
      _
    %v22 = vld [vmem:[%s0] sm:$0xff]
    %v23 = vld [vmem:[%s0 + $0x8] sm:$0xff]
    %v24 = vld [vmem:[%s1] sm:$0xff]
    %vm25 = vcmask 261120
    %v26 = vsel %vm25, %v22, 0.0
    %27 = vadd.xlane.f32.xlu0 %v26
    %v28 = vpop.xlane.xlu0 %27
    %v29 = vsel %vm25, %v23, 0.0
    %30 = vadd.xlane.f32.xlu0 %v29
    %v31 = vpop.xlane.xlu0 %30
    %v32 = vrcp.pop 32.0
    %v33 = vmul.f32 %v28, %v32
    %v34 = vmul.f32 %v31, %v32
    %v35 = vsub.f32 %v22, %v33
    %v36 = vsub.f32 %v23, %v34
    %v37 = vmul.f32 %v35, %v35
    %v38 = vmul.f32 %v36, %v36
    %v39 = vsel %vm25, %v37, 0.0
    %40 = vadd.xlane.f32.xlu0 %v39
    %v41 = vpop.xlane.xlu0 %40
    %v42 = vsel %vm25, %v38, 0.0
    %43 = vadd.xlane.f32.xlu0 %v42
    %v44 = vpop.xlane.xlu0 %43
    %v45 = vmul.f32 %v41, %v32
    %v46 = vmul.f32 %v44, %v32
    %v47 = vadd.f32 %v45, 1e-05
    %v48 = vadd.f32 %v46, 1e-05
    %v49 = vrsqrt.pop %v47
    %v50 = vrsqrt.pop %v48
    %v51 = vmul.f32 %v35, %v49
    %v52 = vmul.f32 %v36, %v50
    %v53 = vlaneseq
    %v54 = vshrl.u32 %v53, 7
    %v55 = vsub.s32 0, %v54
    %v56 = vrot.slane %v24, %v55
    %v57 = vmul.f32 %v51, %v56
    %v58 = vmul.f32 %v52, %v56
    %v59 = vlaneseq
    %v60 = vshrl.u32 %v59, 7
    %v61 = vsub.s32 1, %v60
    %v62 = vrot.slane %v24, %v61
    %v63 = vadd.f32 %v57, %v62
    %v64 = vadd.f32 %v58, %v62
    %v65 = vpack.c.bf16 %v64, %v63
    %v66 = vld [vmem:[%s2] sm:$0xf]
    %v67 = vld [vmem:[%s2 + $0x4] sm:$0xf]
    %v68 = vld [vmem:[%s2 + $0x8] sm:$0xf]
    %v69 = vld [vmem:[%s2 + $0xc] sm:$0xf]
    %v70 = vlaneseq
    %v71 = vshrl.u32 %v70, 7
    %v72 = vsub.s32 4, %v71
    %v73 = vrot.slane %v24, %v72
    %v78 = vunpack.c.l.b16 %v66
    %v79 = vunpack.c.l.b16 %v67
    %v80 = vunpack.c.l.b16 %v68
    %v81 = vunpack.c.l.b16 %v69
    %v82 = vpack.c.b16 %v79, %v78
    %v83 = vpack.c.b16 %v81, %v80
    %v87 = vsel %vm25, %v65, 0
    %89 = vmatprep.subr.bf16.mxu0 0
    %90 = vmatpush1.bf16.msra.mxu0 %v82
    %91 = vmatprep.subr.bf16.mxu0 0
    %92 = vmatpush1.bf16.msra.mxu0 %v83
    %93 = vmatprep.subr.bf16.mxu0 0
    %94 = vmatpush1.bf16.msra.mxu0 0
    %95 = vmatprep.subr.bf16.mxu0 0
    %96 = vmatpush1.bf16.msra.mxu0 0
    %97 = vmatprep.subr.bf16.mxu0 0
    %98 = vmatpush1.bf16.msra.mxu0 0
    %99 = vmatprep.subr.bf16.mxu0 0
    %100 = vmatpush1.bf16.msra.mxu0 0
    %101 = vmatprep.subr.bf16.mxu0 0
    %102 = vmatpush1.bf16.msra.mxu0 0
    %103 = vmatprep.subr.bf16.mxu0 0
    %104 = vmatpush1.bf16.msra.mxu0 0
    %105 = vmatprep.subr.bf16.mxu0 0
    %106 = vmatpush1.bf16.msra.mxu0 0
    %107 = vmatprep.subr.bf16.mxu0 0
    %108 = vmatpush1.bf16.msra.mxu0 0
    %109 = vmatprep.subr.bf16.mxu0 0
    %110 = vmatpush1.bf16.msra.mxu0 0
    %111 = vmatprep.subr.bf16.mxu0 0
    %112 = vmatpush1.bf16.msra.mxu0 0
    %113 = vmatprep.subr.bf16.mxu0 0
    %114 = vmatpush1.bf16.msra.mxu0 0
    %115 = vmatprep.subr.bf16.mxu0 0
    %116 = vmatpush1.bf16.msra.mxu0 0
    %117 = vmatprep.subr.bf16.mxu0 0
    %118 = vmatpush1.bf16.msra.mxu0 0
    %119 = vmatprep.subr.bf16.mxu0 0
    %120 = vmatpush1.bf16.msra.mxu0 0
    %121 = vmatprep.mubr.bf16.mxu0 0
    %122 = vmatmul.mubr.bf16.gmra.mrb[0].mxu0 %v87
    %v123 = vpop.f32.mrb[0].mxu0
    %v124 = vadd.f32 %v73, %v123
    %v125 = vpop.f32.mrb[0].mxu0
    %v126 = vpop.f32.mrb[0].mxu0
    %v127 = vadd.f32 %v73, %v126
    %v128 = vpop.f32.mrb[0].mxu0
    %129 = vdwg.mxu0
    %131 = vrot.lane.b32.xlu0 %v124, 120
    %v132 = vpop.permute.xlu0 %131
    %134 = vrot.lane.b32.xlu0 %v124, 112
    %v135 = vpop.permute.xlu0 %134
    %137 = vrot.lane.b32.xlu0 %v124, 104
    %v138 = vpop.permute.xlu0 %137
    %141 = vrot.lane.b32.xlu0 %v127, 120
    %v142 = vpop.permute.xlu0 %141
    %144 = vrot.lane.b32.xlu0 %v127, 112
    %v145 = vpop.permute.xlu0 %144
    %147 = vrot.lane.b32.xlu0 %v127, 104
    %v148 = vpop.permute.xlu0 %147
    %v150 = vpack.c.bf16 %v124, %v124
    %v151 = vpack.c.bf16 %v132, %v132
    %v152 = vpack.c.bf16 %v135, %v135
    %v153 = vpack.c.bf16 %v138, %v138
    %v154 = vpack.c.bf16 %v127, %v127
    %v155 = vpack.c.bf16 %v142, %v142
    %v156 = vpack.c.bf16 %v145, %v145
    %v157 = vpack.c.bf16 %v148, %v148
    %159 = vrot.lane.b32.xlu0 %v150, 96
    %v160 = vpop.permute.xlu0 %159
    %vm161 = vcmask 64512
    %v163 = vsel %vm161, %v150, 0
    %v166 = vsel %vm161, %v160, 0
    %168 = vmatprep.subr.bf16.mxu0 0
    %169 = vmatpush1.bf16.xpose.msra.mxu0 %v166
    %170 = vmatprep.subr.bf16.mxu0 0
    %171 = vmatpush1.bf16.xpose.msra.mxu0 0
    %172 = vmatprep.subr.bf16.mxu0 0
    %173 = vmatpush1.bf16.xpose.msra.mxu0 0
    %174 = vmatprep.subr.bf16.mxu0 0
    %175 = vmatpush1.bf16.xpose.msra.mxu0 0
    %176 = vmatprep.subr.bf16.mxu0 0
    %177 = vmatpush1.bf16.xpose.msra.mxu0 0
    %178 = vmatprep.subr.bf16.mxu0 0
    %179 = vmatpush1.bf16.xpose.msra.mxu0 0
    %180 = vmatprep.subr.bf16.mxu0 0
    %181 = vmatpush1.bf16.xpose.msra.mxu0 0
    %182 = vmatprep.subr.bf16.mxu0 0
    %183 = vmatpush1.bf16.xpose.msra.mxu0 0
    %184 = vmatprep.subr.bf16.mxu0 0
    %185 = vmatpush1.bf16.xpose.msra.mxu0 0
    %186 = vmatprep.subr.bf16.mxu0 0
    %187 = vmatpush1.bf16.xpose.msra.mxu0 0
    %188 = vmatprep.subr.bf16.mxu0 0
    %189 = vmatpush1.bf16.xpose.msra.mxu0 0
    %190 = vmatprep.subr.bf16.mxu0 0
    %191 = vmatpush1.bf16.xpose.msra.mxu0 0
    %192 = vmatprep.subr.bf16.mxu0 0
    %193 = vmatpush1.bf16.xpose.msra.mxu0 0
    %194 = vmatprep.subr.bf16.mxu0 0
    %195 = vmatpush1.bf16.xpose.msra.mxu0 0
    %196 = vmatprep.subr.bf16.mxu0 0
    %197 = vmatpush1.bf16.xpose.msra.mxu0 0
    %198 = vmatprep.subr.bf16.mxu0 0
    %199 = vmatpush1.bf16.xpose.msra.mxu0 0
    %200 = vmatprep.mubr.bf16.mxu0 0
    %201 = vmatmul.mubr.bf16.gmra.mrb[0].mxu0 %v163
    %v202 = vpop.f32.mrb[0].mxu0
    %v203 = vadd.f32 0.0, %v202
    %v204 = vpop.f32.mrb[0].mxu0
    %v205 = vpop.f32.mrb[0].mxu0
    %v206 = vpop.f32.mrb[0].mxu0
    %207 = vdwg.mxu0
    %209 = vrot.lane.b32.xlu0 %v151, 96
    %v210 = vpop.permute.xlu0 %209
    %v212 = vsel %vm161, %v151, 0
    %v215 = vsel %vm161, %v210, 0
    %217 = vmatprep.subr.bf16.mxu0 0
    %218 = vmatpush1.bf16.xpose.msra.mxu0 %v215
    %219 = vmatprep.subr.bf16.mxu0 0
    %220 = vmatpush1.bf16.xpose.msra.mxu0 0
    %221 = vmatprep.subr.bf16.mxu0 0
    %222 = vmatpush1.bf16.xpose.msra.mxu0 0
    %223 = vmatprep.subr.bf16.mxu0 0
    %224 = vmatpush1.bf16.xpose.msra.mxu0 0
    %225 = vmatprep.subr.bf16.mxu0 0
    %226 = vmatpush1.bf16.xpose.msra.mxu0 0
    %227 = vmatprep.subr.bf16.mxu0 0
    %228 = vmatpush1.bf16.xpose.msra.mxu0 0
    %229 = vmatprep.subr.bf16.mxu0 0
    %230 = vmatpush1.bf16.xpose.msra.mxu0 0
    %231 = vmatprep.subr.bf16.mxu0 0
    %232 = vmatpush1.bf16.xpose.msra.mxu0 0
    %233 = vmatprep.subr.bf16.mxu0 0
    %234 = vmatpush1.bf16.xpose.msra.mxu0 0
    %235 = vmatprep.subr.bf16.mxu0 0
    %236 = vmatpush1.bf16.xpose.msra.mxu0 0
    %237 = vmatprep.subr.bf16.mxu0 0
    %238 = vmatpush1.bf16.xpose.msra.mxu0 0
    %239 = vmatprep.subr.bf16.mxu0 0
    %240 = vmatpush1.bf16.xpose.msra.mxu0 0
    %241 = vmatprep.subr.bf16.mxu0 0
    %242 = vmatpush1.bf16.xpose.msra.mxu0 0
    %243 = vmatprep.subr.bf16.mxu0 0
    %244 = vmatpush1.bf16.xpose.msra.mxu0 0
    %245 = vmatprep.subr.bf16.mxu0 0
    %246 = vmatpush1.bf16.xpose.msra.mxu0 0
    %247 = vmatprep.subr.bf16.mxu0 0
    %248 = vmatpush1.bf16.xpose.msra.mxu0 0
    %249 = vmatprep.mubr.bf16.mxu0 0
    %250 = vmatmul.mubr.bf16.gmra.mrb[0].mxu0 %v212
    %v251 = vpop.f32.mrb[0].mxu0
    %v252 = vadd.f32 0.0, %v251
    %v253 = vpop.f32.mrb[0].mxu0
    %v254 = vpop.f32.mrb[0].mxu0
    %v255 = vpop.f32.mrb[0].mxu0
    %256 = vdwg.mxu0
    %258 = vrot.lane.b32.xlu0 %v152, 96
    %v259 = vpop.permute.xlu0 %258
    %v261 = vsel %vm161, %v152, 0
    %v264 = vsel %vm161, %v259, 0
    %266 = vmatprep.subr.bf16.mxu0 0
    %267 = vmatpush1.bf16.xpose.msra.mxu0 %v264
    %268 = vmatprep.subr.bf16.mxu0 0
    %269 = vmatpush1.bf16.xpose.msra.mxu0 0
    %270 = vmatprep.subr.bf16.mxu0 0
    %271 = vmatpush1.bf16.xpose.msra.mxu0 0
    %272 = vmatprep.subr.bf16.mxu0 0
    %273 = vmatpush1.bf16.xpose.msra.mxu0 0
    %274 = vmatprep.subr.bf16.mxu0 0
    %275 = vmatpush1.bf16.xpose.msra.mxu0 0
    %276 = vmatprep.subr.bf16.mxu0 0
    %277 = vmatpush1.bf16.xpose.msra.mxu0 0
    %278 = vmatprep.subr.bf16.mxu0 0
    %279 = vmatpush1.bf16.xpose.msra.mxu0 0
    %280 = vmatprep.subr.bf16.mxu0 0
    %281 = vmatpush1.bf16.xpose.msra.mxu0 0
    %282 = vmatprep.subr.bf16.mxu0 0
    %283 = vmatpush1.bf16.xpose.msra.mxu0 0
    %284 = vmatprep.subr.bf16.mxu0 0
    %285 = vmatpush1.bf16.xpose.msra.mxu0 0
    %286 = vmatprep.subr.bf16.mxu0 0
    %287 = vmatpush1.bf16.xpose.msra.mxu0 0
    %288 = vmatprep.subr.bf16.mxu0 0
    %289 = vmatpush1.bf16.xpose.msra.mxu0 0
    %290 = vmatprep.subr.bf16.mxu0 0
    %291 = vmatpush1.bf16.xpose.msra.mxu0 0
    %292 = vmatprep.subr.bf16.mxu0 0
    %293 = vmatpush1.bf16.xpose.msra.mxu0 0
    %294 = vmatprep.subr.bf16.mxu0 0
    %295 = vmatpush1.bf16.xpose.msra.mxu0 0
    %296 = vmatprep.subr.bf16.mxu0 0
    %297 = vmatpush1.bf16.xpose.msra.mxu0 0
    %298 = vmatprep.mubr.bf16.mxu0 0
    %299 = vmatmul.mubr.bf16.gmra.mrb[0].mxu0 %v261
    %v300 = vpop.f32.mrb[0].mxu0
    %v301 = vadd.f32 0.0, %v300
    %v302 = vpop.f32.mrb[0].mxu0
    %v303 = vpop.f32.mrb[0].mxu0
    %v304 = vpop.f32.mrb[0].mxu0
    %305 = vdwg.mxu0
    %307 = vrot.lane.b32.xlu0 %v153, 96
    %v308 = vpop.permute.xlu0 %307
    %v310 = vsel %vm161, %v153, 0
    %v313 = vsel %vm161, %v308, 0
    %315 = vmatprep.subr.bf16.mxu0 0
    %316 = vmatpush1.bf16.xpose.msra.mxu0 %v313
    %317 = vmatprep.subr.bf16.mxu0 0
    %318 = vmatpush1.bf16.xpose.msra.mxu0 0
    %319 = vmatprep.subr.bf16.mxu0 0
    %320 = vmatpush1.bf16.xpose.msra.mxu0 0
    %321 = vmatprep.subr.bf16.mxu0 0
    %322 = vmatpush1.bf16.xpose.msra.mxu0 0
    %323 = vmatprep.subr.bf16.mxu0 0
    %324 = vmatpush1.bf16.xpose.msra.mxu0 0
    %325 = vmatprep.subr.bf16.mxu0 0
    %326 = vmatpush1.bf16.xpose.msra.mxu0 0
    %327 = vmatprep.subr.bf16.mxu0 0
    %328 = vmatpush1.bf16.xpose.msra.mxu0 0
    %329 = vmatprep.subr.bf16.mxu0 0
    %330 = vmatpush1.bf16.xpose.msra.mxu0 0
    %331 = vmatprep.subr.bf16.mxu0 0
    %332 = vmatpush1.bf16.xpose.msra.mxu0 0
    %333 = vmatprep.subr.bf16.mxu0 0
    %334 = vmatpush1.bf16.xpose.msra.mxu0 0
    %335 = vmatprep.subr.bf16.mxu0 0
    %336 = vmatpush1.bf16.xpose.msra.mxu0 0
    %337 = vmatprep.subr.bf16.mxu0 0
    %338 = vmatpush1.bf16.xpose.msra.mxu0 0
    %339 = vmatprep.subr.bf16.mxu0 0
    %340 = vmatpush1.bf16.xpose.msra.mxu0 0
    %341 = vmatprep.subr.bf16.mxu0 0
    %342 = vmatpush1.bf16.xpose.msra.mxu0 0
    %343 = vmatprep.subr.bf16.mxu0 0
    %344 = vmatpush1.bf16.xpose.msra.mxu0 0
    %345 = vmatprep.subr.bf16.mxu0 0
    %346 = vmatpush1.bf16.xpose.msra.mxu0 0
    %347 = vmatprep.mubr.bf16.mxu0 0
    %348 = vmatmul.mubr.bf16.gmra.mrb[0].mxu0 %v310
    %v349 = vpop.f32.mrb[0].mxu0
    %v350 = vadd.f32 0.0, %v349
    %v351 = vpop.f32.mrb[0].mxu0
    %v352 = vpop.f32.mrb[0].mxu0
    %v353 = vpop.f32.mrb[0].mxu0
    %354 = vdwg.mxu0
    %356 = vrot.lane.b32.xlu0 %v154, 96
    %v357 = vpop.permute.xlu0 %356
    %v359 = vsel %vm161, %v154, 0
    %v362 = vsel %vm161, %v357, 0
    %364 = vmatprep.subr.bf16.mxu0 0
    %365 = vmatpush1.bf16.xpose.msra.mxu0 %v362
    %366 = vmatprep.subr.bf16.mxu0 0
    %367 = vmatpush1.bf16.xpose.msra.mxu0 0
    %368 = vmatprep.subr.bf16.mxu0 0
    %369 = vmatpush1.bf16.xpose.msra.mxu0 0
    %370 = vmatprep.subr.bf16.mxu0 0
    %371 = vmatpush1.bf16.xpose.msra.mxu0 0
    %372 = vmatprep.subr.bf16.mxu0 0
    %373 = vmatpush1.bf16.xpose.msra.mxu0 0
    %374 = vmatprep.subr.bf16.mxu0 0
    %375 = vmatpush1.bf16.xpose.msra.mxu0 0
    %376 = vmatprep.subr.bf16.mxu0 0
    %377 = vmatpush1.bf16.xpose.msra.mxu0 0
    %378 = vmatprep.subr.bf16.mxu0 0
    %379 = vmatpush1.bf16.xpose.msra.mxu0 0
    %380 = vmatprep.subr.bf16.mxu0 0
    %381 = vmatpush1.bf16.xpose.msra.mxu0 0
    %382 = vmatprep.subr.bf16.mxu0 0
    %383 = vmatpush1.bf16.xpose.msra.mxu0 0
    %384 = vmatprep.subr.bf16.mxu0 0
    %385 = vmatpush1.bf16.xpose.msra.mxu0 0
    %386 = vmatprep.subr.bf16.mxu0 0
    %387 = vmatpush1.bf16.xpose.msra.mxu0 0
    %388 = vmatprep.subr.bf16.mxu0 0
    %389 = vmatpush1.bf16.xpose.msra.mxu0 0
    %390 = vmatprep.subr.bf16.mxu0 0
    %391 = vmatpush1.bf16.xpose.msra.mxu0 0
    %392 = vmatprep.subr.bf16.mxu0 0
    %393 = vmatpush1.bf16.xpose.msra.mxu0 0
    %394 = vmatprep.subr.bf16.mxu0 0
    %395 = vmatpush1.bf16.xpose.msra.mxu0 0
    %396 = vmatprep.mubr.bf16.mxu0 0
    %397 = vmatmul.mubr.bf16.gmra.mrb[0].mxu0 %v359
    %v398 = vpop.f32.mrb[0].mxu0
    %v399 = vadd.f32 0.0, %v398
    %v400 = vpop.f32.mrb[0].mxu0
    %v401 = vpop.f32.mrb[0].mxu0
    %v402 = vpop.f32.mrb[0].mxu0
    %403 = vdwg.mxu0
    %405 = vrot.lane.b32.xlu0 %v155, 96
    %v406 = vpop.permute.xlu0 %405
    %v408 = vsel %vm161, %v155, 0
    %v411 = vsel %vm161, %v406, 0
    %413 = vmatprep.subr.bf16.mxu0 0
    %414 = vmatpush1.bf16.xpose.msra.mxu0 %v411
    %415 = vmatprep.subr.bf16.mxu0 0
    %416 = vmatpush1.bf16.xpose.msra.mxu0 0
    %417 = vmatprep.subr.bf16.mxu0 0
    %418 = vmatpush1.bf16.xpose.msra.mxu0 0
    %419 = vmatprep.subr.bf16.mxu0 0
    %420 = vmatpush1.bf16.xpose.msra.mxu0 0
    %421 = vmatprep.subr.bf16.mxu0 0
    %422 = vmatpush1.bf16.xpose.msra.mxu0 0
    %423 = vmatprep.subr.bf16.mxu0 0
    %424 = vmatpush1.bf16.xpose.msra.mxu0 0
    %425 = vmatprep.subr.bf16.mxu0 0
    %426 = vmatpush1.bf16.xpose.msra.mxu0 0
    %427 = vmatprep.subr.bf16.mxu0 0
    %428 = vmatpush1.bf16.xpose.msra.mxu0 0
    %429 = vmatprep.subr.bf16.mxu0 0
    %430 = vmatpush1.bf16.xpose.msra.mxu0 0
    %431 = vmatprep.subr.bf16.mxu0 0
    %432 = vmatpush1.bf16.xpose.msra.mxu0 0
    %433 = vmatprep.subr.bf16.mxu0 0
    %434 = vmatpush1.bf16.xpose.msra.mxu0 0
    %435 = vmatprep.subr.bf16.mxu0 0
    %436 = vmatpush1.bf16.xpose.msra.mxu0 0
    %437 = vmatprep.subr.bf16.mxu0 0
    %438 = vmatpush1.bf16.xpose.msra.mxu0 0
    %439 = vmatprep.subr.bf16.mxu0 0
    %440 = vmatpush1.bf16.xpose.msra.mxu0 0
    %441 = vmatprep.subr.bf16.mxu0 0
    %442 = vmatpush1.bf16.xpose.msra.mxu0 0
    %443 = vmatprep.subr.bf16.mxu0 0
    %444 = vmatpush1.bf16.xpose.msra.mxu0 0
    %445 = vmatprep.mubr.bf16.mxu0 0
    %446 = vmatmul.mubr.bf16.gmra.mrb[0].mxu0 %v408
    %v447 = vpop.f32.mrb[0].mxu0
    %v448 = vadd.f32 0.0, %v447
    %v449 = vpop.f32.mrb[0].mxu0
    %v450 = vpop.f32.mrb[0].mxu0
    %v451 = vpop.f32.mrb[0].mxu0
    %452 = vdwg.mxu0
    %454 = vrot.lane.b32.xlu0 %v156, 96
    %v455 = vpop.permute.xlu0 %454
    %v457 = vsel %vm161, %v156, 0
    %v460 = vsel %vm161, %v455, 0
    %462 = vmatprep.subr.bf16.mxu0 0
    %463 = vmatpush1.bf16.xpose.msra.mxu0 %v460
    %464 = vmatprep.subr.bf16.mxu0 0
    %465 = vmatpush1.bf16.xpose.msra.mxu0 0
    %466 = vmatprep.subr.bf16.mxu0 0
    %467 = vmatpush1.bf16.xpose.msra.mxu0 0
    %468 = vmatprep.subr.bf16.mxu0 0
    %469 = vmatpush1.bf16.xpose.msra.mxu0 0
    %470 = vmatprep.subr.bf16.mxu0 0
    %471 = vmatpush1.bf16.xpose.msra.mxu0 0
    %472 = vmatprep.subr.bf16.mxu0 0
    %473 = vmatpush1.bf16.xpose.msra.mxu0 0
    %474 = vmatprep.subr.bf16.mxu0 0
    %475 = vmatpush1.bf16.xpose.msra.mxu0 0
    %476 = vmatprep.subr.bf16.mxu0 0
    %477 = vmatpush1.bf16.xpose.msra.mxu0 0
    %478 = vmatprep.subr.bf16.mxu0 0
    %479 = vmatpush1.bf16.xpose.msra.mxu0 0
    %480 = vmatprep.subr.bf16.mxu0 0
    %481 = vmatpush1.bf16.xpose.msra.mxu0 0
    %482 = vmatprep.subr.bf16.mxu0 0
    %483 = vmatpush1.bf16.xpose.msra.mxu0 0
    %484 = vmatprep.subr.bf16.mxu0 0
    %485 = vmatpush1.bf16.xpose.msra.mxu0 0
    %486 = vmatprep.subr.bf16.mxu0 0
    %487 = vmatpush1.bf16.xpose.msra.mxu0 0
    %488 = vmatprep.subr.bf16.mxu0 0
    %489 = vmatpush1.bf16.xpose.msra.mxu0 0
    %490 = vmatprep.subr.bf16.mxu0 0
    %491 = vmatpush1.bf16.xpose.msra.mxu0 0
    %492 = vmatprep.subr.bf16.mxu0 0
    %493 = vmatpush1.bf16.xpose.msra.mxu0 0
    %494 = vmatprep.mubr.bf16.mxu0 0
    %495 = vmatmul.mubr.bf16.gmra.mrb[0].mxu0 %v457
    %v496 = vpop.f32.mrb[0].mxu0
    %v497 = vadd.f32 0.0, %v496
    %v498 = vpop.f32.mrb[0].mxu0
    %v499 = vpop.f32.mrb[0].mxu0
    %v500 = vpop.f32.mrb[0].mxu0
    %501 = vdwg.mxu0
    %503 = vrot.lane.b32.xlu0 %v157, 96
    %v504 = vpop.permute.xlu0 %503
    %v506 = vsel %vm161, %v157, 0
    %v509 = vsel %vm161, %v504, 0
    %511 = vmatprep.subr.bf16.mxu0 0
    %512 = vmatpush1.bf16.xpose.msra.mxu0 %v509
    %513 = vmatprep.subr.bf16.mxu0 0
    %514 = vmatpush1.bf16.xpose.msra.mxu0 0
    %515 = vmatprep.subr.bf16.mxu0 0
    %516 = vmatpush1.bf16.xpose.msra.mxu0 0
    %517 = vmatprep.subr.bf16.mxu0 0
    %518 = vmatpush1.bf16.xpose.msra.mxu0 0
    %519 = vmatprep.subr.bf16.mxu0 0
    %520 = vmatpush1.bf16.xpose.msra.mxu0 0
    %521 = vmatprep.subr.bf16.mxu0 0
    %522 = vmatpush1.bf16.xpose.msra.mxu0 0
    %523 = vmatprep.subr.bf16.mxu0 0
    %524 = vmatpush1.bf16.xpose.msra.mxu0 0
    %525 = vmatprep.subr.bf16.mxu0 0
    %526 = vmatpush1.bf16.xpose.msra.mxu0 0
    %527 = vmatprep.subr.bf16.mxu0 0
    %528 = vmatpush1.bf16.xpose.msra.mxu0 0
    %529 = vmatprep.subr.bf16.mxu0 0
    %530 = vmatpush1.bf16.xpose.msra.mxu0 0
    %531 = vmatprep.subr.bf16.mxu0 0
    %532 = vmatpush1.bf16.xpose.msra.mxu0 0
    %533 = vmatprep.subr.bf16.mxu0 0
    %534 = vmatpush1.bf16.xpose.msra.mxu0 0
    %535 = vmatprep.subr.bf16.mxu0 0
    %536 = vmatpush1.bf16.xpose.msra.mxu0 0
    %537 = vmatprep.subr.bf16.mxu0 0
    %538 = vmatpush1.bf16.xpose.msra.mxu0 0
    %539 = vmatprep.subr.bf16.mxu0 0
    %540 = vmatpush1.bf16.xpose.msra.mxu0 0
    %541 = vmatprep.subr.bf16.mxu0 0
    %542 = vmatpush1.bf16.xpose.msra.mxu0 0
    %543 = vmatprep.mubr.bf16.mxu0 0
    %544 = vmatmul.mubr.bf16.gmra.mrb[0].mxu0 %v506
    %v545 = vpop.f32.mrb[0].mxu0
    %v546 = vadd.f32 0.0, %v545
    %v547 = vpop.f32.mrb[0].mxu0
    %v548 = vpop.f32.mrb[0].mxu0
    %v549 = vpop.f32.mrb[0].mxu0
    %550 = vdwg.mxu0
    %v551 = vmul.f32 %v203, 0.35355338
    %v552 = vmul.f32 %v252, 0.35355338
    %v553 = vmul.f32 %v301, 0.35355338
    %v554 = vmul.f32 %v350, 0.35355338
    %v555 = vmul.f32 %v399, 0.35355338
    %v556 = vmul.f32 %v448, 0.35355338
    %v557 = vmul.f32 %v497, 0.35355338
    %v558 = vmul.f32 %v546, 0.35355338
    %v559 = vlaneseq
    %v560 = vshrl.u32 %v559, 7
    %v561 = vlaneseq
    %v562 = vand.u32 %v561, 127
    %vm563 = vcmp.le.s32.totalorder %v562, %v560
    %v564 = vsel %vm563, 0.0, -1e+30
    %v565 = vadd.f32 %v551, %v564
    %v566 = vadd.f32 %v552, %v564
    %v567 = vadd.f32 %v553, %v564
    %v568 = vadd.f32 %v554, %v564
    %v569 = vadd.f32 %v555, %v564
    %v570 = vadd.f32 %v556, %v564
    %v571 = vadd.f32 %v557, %v564
    %v572 = vadd.f32 %v558, %v564
    %v573 = vsel %vm161, %v565, -inf
    %574 = vmax.xlane.f32.xlu0 %v573
    %v575 = vpop.xlane.xlu0 %574
    %v576 = vsel %vm161, %v566, -inf
    %577 = vmax.xlane.f32.xlu0 %v576
    %v578 = vpop.xlane.xlu0 %577
    %v579 = vsel %vm161, %v567, -inf
    %580 = vmax.xlane.f32.xlu0 %v579
    %v581 = vpop.xlane.xlu0 %580
    %v582 = vsel %vm161, %v568, -inf
    %583 = vmax.xlane.f32.xlu0 %v582
    %v584 = vpop.xlane.xlu0 %583
    %v585 = vsel %vm161, %v569, -inf
    %586 = vmax.xlane.f32.xlu0 %v585
    %v587 = vpop.xlane.xlu0 %586
    %v588 = vsel %vm161, %v570, -inf
    %589 = vmax.xlane.f32.xlu0 %v588
    %v590 = vpop.xlane.xlu0 %589
    %v591 = vsel %vm161, %v571, -inf
    %592 = vmax.xlane.f32.xlu0 %v591
    %v593 = vpop.xlane.xlu0 %592
    %v594 = vsel %vm161, %v572, -inf
    %595 = vmax.xlane.f32.xlu0 %v594
    %v596 = vpop.xlane.xlu0 %595
    %v597 = vsub.f32 %v565, %v575
    %v598 = vsub.f32 %v566, %v578
    %v599 = vsub.f32 %v567, %v581
    %v600 = vsub.f32 %v568, %v584
    %v601 = vsub.f32 %v569, %v587
    %v602 = vsub.f32 %v570, %v590
    %v603 = vsub.f32 %v571, %v593
    %v604 = vsub.f32 %v572, %v596
    %v605 = vmul.f32 %v597, 1.442695
    %v606 = vpow.pop %v605
    %v607 = vmul.f32 %v598, 1.442695
    %v608 = vpow.pop %v607
    %v609 = vmul.f32 %v599, 1.442695
    %v610 = vpow.pop %v609
    %v611 = vmul.f32 %v600, 1.442695
    %v612 = vpow.pop %v611
    %v613 = vmul.f32 %v601, 1.442695
    %v614 = vpow.pop %v613
    %v615 = vmul.f32 %v602, 1.442695
    %v616 = vpow.pop %v615
    %v617 = vmul.f32 %v603, 1.442695
    %v618 = vpow.pop %v617
    %v619 = vmul.f32 %v604, 1.442695
    %v620 = vpow.pop %v619
    %v621 = vsel %vm161, %v606, 0.0
    %622 = vadd.xlane.f32.xlu0 %v621
    %v623 = vpop.xlane.xlu0 %622
    %v624 = vsel %vm161, %v608, 0.0
    %625 = vadd.xlane.f32.xlu0 %v624
    %v626 = vpop.xlane.xlu0 %625
    %v627 = vsel %vm161, %v610, 0.0
    %628 = vadd.xlane.f32.xlu0 %v627
    %v629 = vpop.xlane.xlu0 %628
    %v630 = vsel %vm161, %v612, 0.0
    %631 = vadd.xlane.f32.xlu0 %v630
    %v632 = vpop.xlane.xlu0 %631
    %v633 = vsel %vm161, %v614, 0.0
    %634 = vadd.xlane.f32.xlu0 %v633
    %v635 = vpop.xlane.xlu0 %634
    %v636 = vsel %vm161, %v616, 0.0
    %637 = vadd.xlane.f32.xlu0 %v636
    %v638 = vpop.xlane.xlu0 %637
    %v639 = vsel %vm161, %v618, 0.0
    %640 = vadd.xlane.f32.xlu0 %v639
    %v641 = vpop.xlane.xlu0 %640
    %v642 = vsel %vm161, %v620, 0.0
    %643 = vadd.xlane.f32.xlu0 %v642
    %v644 = vpop.xlane.xlu0 %643
    %v645 = vrcp.pop %v623
    %v646 = vrcp.pop %v626
    %v647 = vrcp.pop %v629
    %v648 = vrcp.pop %v632
    %v649 = vrcp.pop %v635
    %v650 = vrcp.pop %v638
    %v651 = vrcp.pop %v641
    %v652 = vrcp.pop %v644
    %v653 = vmul.f32 %v606, %v645
    %v654 = vmul.f32 %v608, %v646
    %v655 = vmul.f32 %v610, %v647
    %v656 = vmul.f32 %v612, %v648
    %v657 = vmul.f32 %v614, %v649
    %v658 = vmul.f32 %v616, %v650
    %v659 = vmul.f32 %v618, %v651
    %v660 = vmul.f32 %v620, %v652
    %v661 = vpack.c.bf16 %v653, %v653
    %v662 = vpack.c.bf16 %v654, %v654
    %v663 = vpack.c.bf16 %v655, %v655
    %v664 = vpack.c.bf16 %v656, %v656
    %v665 = vpack.c.bf16 %v657, %v657
    %v666 = vpack.c.bf16 %v658, %v658
    %v667 = vpack.c.bf16 %v659, %v659
    %v668 = vpack.c.bf16 %v660, %v660
    %669 = vrot.lane.b32.xlu0 %v150, 64
    %v670 = vpop.permute.xlu0 %669
    %v672 = vsel %vm161, %v661, 0
    %vm674 = vcmask 1043456
    %v676 = vsel %vm674, %v670, 0
    %678 = vmatprep.subr.bf16.mxu0 0
    %679 = vmatpush1.bf16.msra.mxu0 %v676
    %680 = vmatprep.subr.bf16.mxu0 0
    %681 = vmatpush1.bf16.msra.mxu0 0
    %682 = vmatprep.subr.bf16.mxu0 0
    %683 = vmatpush1.bf16.msra.mxu0 0
    %684 = vmatprep.subr.bf16.mxu0 0
    %685 = vmatpush1.bf16.msra.mxu0 0
    %686 = vmatprep.subr.bf16.mxu0 0
    %687 = vmatpush1.bf16.msra.mxu0 0
    %688 = vmatprep.subr.bf16.mxu0 0
    %689 = vmatpush1.bf16.msra.mxu0 0
    %690 = vmatprep.subr.bf16.mxu0 0
    %691 = vmatpush1.bf16.msra.mxu0 0
    %692 = vmatprep.subr.bf16.mxu0 0
    %693 = vmatpush1.bf16.msra.mxu0 0
    %694 = vmatprep.subr.bf16.mxu0 0
    %695 = vmatpush1.bf16.msra.mxu0 0
    %696 = vmatprep.subr.bf16.mxu0 0
    %697 = vmatpush1.bf16.msra.mxu0 0
    %698 = vmatprep.subr.bf16.mxu0 0
    %699 = vmatpush1.bf16.msra.mxu0 0
    %700 = vmatprep.subr.bf16.mxu0 0
    %701 = vmatpush1.bf16.msra.mxu0 0
    %702 = vmatprep.subr.bf16.mxu0 0
    %703 = vmatpush1.bf16.msra.mxu0 0
    %704 = vmatprep.subr.bf16.mxu0 0
    %705 = vmatpush1.bf16.msra.mxu0 0
    %706 = vmatprep.subr.bf16.mxu0 0
    %707 = vmatpush1.bf16.msra.mxu0 0
    %708 = vmatprep.subr.bf16.mxu0 0
    %709 = vmatpush1.bf16.msra.mxu0 0
    %710 = vmatprep.mubr.bf16.mxu0 0
    %711 = vmatmul.mubr.bf16.gmra.mrb[0].mxu0 %v672
    %v712 = vpop.f32.mrb[0].mxu0
    %v713 = vadd.f32 0.0, %v712
    %v714 = vpop.f32.mrb[0].mxu0
    %v715 = vpop.f32.mrb[0].mxu0
    %v716 = vpop.f32.mrb[0].mxu0
    %717 = vdwg.mxu0
    %718 = vrot.lane.b32.xlu0 %v151, 64
    %v719 = vpop.permute.xlu0 %718
    %v721 = vsel %vm161, %v662, 0
    %v724 = vsel %vm674, %v719, 0
    %726 = vmatprep.subr.bf16.mxu0 0
    %727 = vmatpush1.bf16.msra.mxu0 %v724
    %728 = vmatprep.subr.bf16.mxu0 0
    %729 = vmatpush1.bf16.msra.mxu0 0
    %730 = vmatprep.subr.bf16.mxu0 0
    %731 = vmatpush1.bf16.msra.mxu0 0
    %732 = vmatprep.subr.bf16.mxu0 0
    %733 = vmatpush1.bf16.msra.mxu0 0
    %734 = vmatprep.subr.bf16.mxu0 0
    %735 = vmatpush1.bf16.msra.mxu0 0
    %736 = vmatprep.subr.bf16.mxu0 0
    %737 = vmatpush1.bf16.msra.mxu0 0
    %738 = vmatprep.subr.bf16.mxu0 0
    %739 = vmatpush1.bf16.msra.mxu0 0
    %740 = vmatprep.subr.bf16.mxu0 0
    %741 = vmatpush1.bf16.msra.mxu0 0
    %742 = vmatprep.subr.bf16.mxu0 0
    %743 = vmatpush1.bf16.msra.mxu0 0
    %744 = vmatprep.subr.bf16.mxu0 0
    %745 = vmatpush1.bf16.msra.mxu0 0
    %746 = vmatprep.subr.bf16.mxu0 0
    %747 = vmatpush1.bf16.msra.mxu0 0
    %748 = vmatprep.subr.bf16.mxu0 0
    %749 = vmatpush1.bf16.msra.mxu0 0
    %750 = vmatprep.subr.bf16.mxu0 0
    %751 = vmatpush1.bf16.msra.mxu0 0
    %752 = vmatprep.subr.bf16.mxu0 0
    %753 = vmatpush1.bf16.msra.mxu0 0
    %754 = vmatprep.subr.bf16.mxu0 0
    %755 = vmatpush1.bf16.msra.mxu0 0
    %756 = vmatprep.subr.bf16.mxu0 0
    %757 = vmatpush1.bf16.msra.mxu0 0
    %758 = vmatprep.mubr.bf16.mxu0 0
    %759 = vmatmul.mubr.bf16.gmra.mrb[0].mxu0 %v721
    %v760 = vpop.f32.mrb[0].mxu0
    %v761 = vadd.f32 0.0, %v760
    %v762 = vpop.f32.mrb[0].mxu0
    %v763 = vpop.f32.mrb[0].mxu0
    %v764 = vpop.f32.mrb[0].mxu0
    %765 = vdwg.mxu0
    %766 = vrot.lane.b32.xlu0 %v152, 64
    %v767 = vpop.permute.xlu0 %766
    %v769 = vsel %vm161, %v663, 0
    %v772 = vsel %vm674, %v767, 0
    %774 = vmatprep.subr.bf16.mxu0 0
    %775 = vmatpush1.bf16.msra.mxu0 %v772
    %776 = vmatprep.subr.bf16.mxu0 0
    %777 = vmatpush1.bf16.msra.mxu0 0
    %778 = vmatprep.subr.bf16.mxu0 0
    %779 = vmatpush1.bf16.msra.mxu0 0
    %780 = vmatprep.subr.bf16.mxu0 0
    %781 = vmatpush1.bf16.msra.mxu0 0
    %782 = vmatprep.subr.bf16.mxu0 0
    %783 = vmatpush1.bf16.msra.mxu0 0
    %784 = vmatprep.subr.bf16.mxu0 0
    %785 = vmatpush1.bf16.msra.mxu0 0
    %786 = vmatprep.subr.bf16.mxu0 0
    %787 = vmatpush1.bf16.msra.mxu0 0
    %788 = vmatprep.subr.bf16.mxu0 0
    %789 = vmatpush1.bf16.msra.mxu0 0
    %790 = vmatprep.subr.bf16.mxu0 0
    %791 = vmatpush1.bf16.msra.mxu0 0
    %792 = vmatprep.subr.bf16.mxu0 0
    %793 = vmatpush1.bf16.msra.mxu0 0
    %794 = vmatprep.subr.bf16.mxu0 0
    %795 = vmatpush1.bf16.msra.mxu0 0
    %796 = vmatprep.subr.bf16.mxu0 0
    %797 = vmatpush1.bf16.msra.mxu0 0
    %798 = vmatprep.subr.bf16.mxu0 0
    %799 = vmatpush1.bf16.msra.mxu0 0
    %800 = vmatprep.subr.bf16.mxu0 0
    %801 = vmatpush1.bf16.msra.mxu0 0
    %802 = vmatprep.subr.bf16.mxu0 0
    %803 = vmatpush1.bf16.msra.mxu0 0
    %804 = vmatprep.subr.bf16.mxu0 0
    %805 = vmatpush1.bf16.msra.mxu0 0
    %806 = vmatprep.mubr.bf16.mxu0 0
    %807 = vmatmul.mubr.bf16.gmra.mrb[0].mxu0 %v769
    %v808 = vpop.f32.mrb[0].mxu0
    %v809 = vadd.f32 0.0, %v808
    %v810 = vpop.f32.mrb[0].mxu0
    %v811 = vpop.f32.mrb[0].mxu0
    %v812 = vpop.f32.mrb[0].mxu0
    %813 = vdwg.mxu0
    %814 = vrot.lane.b32.xlu0 %v153, 64
    %v815 = vpop.permute.xlu0 %814
    %v817 = vsel %vm161, %v664, 0
    %v820 = vsel %vm674, %v815, 0
    %822 = vmatprep.subr.bf16.mxu0 0
    %823 = vmatpush1.bf16.msra.mxu0 %v820
    %824 = vmatprep.subr.bf16.mxu0 0
    %825 = vmatpush1.bf16.msra.mxu0 0
    %826 = vmatprep.subr.bf16.mxu0 0
    %827 = vmatpush1.bf16.msra.mxu0 0
    %828 = vmatprep.subr.bf16.mxu0 0
    %829 = vmatpush1.bf16.msra.mxu0 0
    %830 = vmatprep.subr.bf16.mxu0 0
    %831 = vmatpush1.bf16.msra.mxu0 0
    %832 = vmatprep.subr.bf16.mxu0 0
    %833 = vmatpush1.bf16.msra.mxu0 0
    %834 = vmatprep.subr.bf16.mxu0 0
    %835 = vmatpush1.bf16.msra.mxu0 0
    %836 = vmatprep.subr.bf16.mxu0 0
    %837 = vmatpush1.bf16.msra.mxu0 0
    %838 = vmatprep.subr.bf16.mxu0 0
    %839 = vmatpush1.bf16.msra.mxu0 0
    %840 = vmatprep.subr.bf16.mxu0 0
    %841 = vmatpush1.bf16.msra.mxu0 0
    %842 = vmatprep.subr.bf16.mxu0 0
    %843 = vmatpush1.bf16.msra.mxu0 0
    %844 = vmatprep.subr.bf16.mxu0 0
    %845 = vmatpush1.bf16.msra.mxu0 0
    %846 = vmatprep.subr.bf16.mxu0 0
    %847 = vmatpush1.bf16.msra.mxu0 0
    %848 = vmatprep.subr.bf16.mxu0 0
    %849 = vmatpush1.bf16.msra.mxu0 0
    %850 = vmatprep.subr.bf16.mxu0 0
    %851 = vmatpush1.bf16.msra.mxu0 0
    %852 = vmatprep.subr.bf16.mxu0 0
    %853 = vmatpush1.bf16.msra.mxu0 0
    %854 = vmatprep.mubr.bf16.mxu0 0
    %855 = vmatmul.mubr.bf16.gmra.mrb[0].mxu0 %v817
    %v856 = vpop.f32.mrb[0].mxu0
    %v857 = vadd.f32 0.0, %v856
    %v858 = vpop.f32.mrb[0].mxu0
    %v859 = vpop.f32.mrb[0].mxu0
    %v860 = vpop.f32.mrb[0].mxu0
    %861 = vdwg.mxu0
    %862 = vrot.lane.b32.xlu0 %v154, 64
    %v863 = vpop.permute.xlu0 %862
    %v865 = vsel %vm161, %v665, 0
    %v868 = vsel %vm674, %v863, 0
    %870 = vmatprep.subr.bf16.mxu0 0
    %871 = vmatpush1.bf16.msra.mxu0 %v868
    %872 = vmatprep.subr.bf16.mxu0 0
    %873 = vmatpush1.bf16.msra.mxu0 0
    %874 = vmatprep.subr.bf16.mxu0 0
    %875 = vmatpush1.bf16.msra.mxu0 0
    %876 = vmatprep.subr.bf16.mxu0 0
    %877 = vmatpush1.bf16.msra.mxu0 0
    %878 = vmatprep.subr.bf16.mxu0 0
    %879 = vmatpush1.bf16.msra.mxu0 0
    %880 = vmatprep.subr.bf16.mxu0 0
    %881 = vmatpush1.bf16.msra.mxu0 0
    %882 = vmatprep.subr.bf16.mxu0 0
    %883 = vmatpush1.bf16.msra.mxu0 0
    %884 = vmatprep.subr.bf16.mxu0 0
    %885 = vmatpush1.bf16.msra.mxu0 0
    %886 = vmatprep.subr.bf16.mxu0 0
    %887 = vmatpush1.bf16.msra.mxu0 0
    %888 = vmatprep.subr.bf16.mxu0 0
    %889 = vmatpush1.bf16.msra.mxu0 0
    %890 = vmatprep.subr.bf16.mxu0 0
    %891 = vmatpush1.bf16.msra.mxu0 0
    %892 = vmatprep.subr.bf16.mxu0 0
    %893 = vmatpush1.bf16.msra.mxu0 0
    %894 = vmatprep.subr.bf16.mxu0 0
    %895 = vmatpush1.bf16.msra.mxu0 0
    %896 = vmatprep.subr.bf16.mxu0 0
    %897 = vmatpush1.bf16.msra.mxu0 0
    %898 = vmatprep.subr.bf16.mxu0 0
    %899 = vmatpush1.bf16.msra.mxu0 0
    %900 = vmatprep.subr.bf16.mxu0 0
    %901 = vmatpush1.bf16.msra.mxu0 0
    %902 = vmatprep.mubr.bf16.mxu0 0
    %903 = vmatmul.mubr.bf16.gmra.mrb[0].mxu0 %v865
    %v904 = vpop.f32.mrb[0].mxu0
    %v905 = vadd.f32 0.0, %v904
    %v906 = vpop.f32.mrb[0].mxu0
    %v907 = vpop.f32.mrb[0].mxu0
    %v908 = vpop.f32.mrb[0].mxu0
    %909 = vdwg.mxu0
    %910 = vrot.lane.b32.xlu0 %v155, 64
    %v911 = vpop.permute.xlu0 %910
    %v913 = vsel %vm161, %v666, 0
    %v916 = vsel %vm674, %v911, 0
    %918 = vmatprep.subr.bf16.mxu0 0
    %919 = vmatpush1.bf16.msra.mxu0 %v916
    %920 = vmatprep.subr.bf16.mxu0 0
    %921 = vmatpush1.bf16.msra.mxu0 0
    %922 = vmatprep.subr.bf16.mxu0 0
    %923 = vmatpush1.bf16.msra.mxu0 0
    %924 = vmatprep.subr.bf16.mxu0 0
    %925 = vmatpush1.bf16.msra.mxu0 0
    %926 = vmatprep.subr.bf16.mxu0 0
    %927 = vmatpush1.bf16.msra.mxu0 0
    %928 = vmatprep.subr.bf16.mxu0 0
    %929 = vmatpush1.bf16.msra.mxu0 0
    %930 = vmatprep.subr.bf16.mxu0 0
    %931 = vmatpush1.bf16.msra.mxu0 0
    %932 = vmatprep.subr.bf16.mxu0 0
    %933 = vmatpush1.bf16.msra.mxu0 0
    %934 = vmatprep.subr.bf16.mxu0 0
    %935 = vmatpush1.bf16.msra.mxu0 0
    %936 = vmatprep.subr.bf16.mxu0 0
    %937 = vmatpush1.bf16.msra.mxu0 0
    %938 = vmatprep.subr.bf16.mxu0 0
    %939 = vmatpush1.bf16.msra.mxu0 0
    %940 = vmatprep.subr.bf16.mxu0 0
    %941 = vmatpush1.bf16.msra.mxu0 0
    %942 = vmatprep.subr.bf16.mxu0 0
    %943 = vmatpush1.bf16.msra.mxu0 0
    %944 = vmatprep.subr.bf16.mxu0 0
    %945 = vmatpush1.bf16.msra.mxu0 0
    %946 = vmatprep.subr.bf16.mxu0 0
    %947 = vmatpush1.bf16.msra.mxu0 0
    %948 = vmatprep.subr.bf16.mxu0 0
    %949 = vmatpush1.bf16.msra.mxu0 0
    %950 = vmatprep.mubr.bf16.mxu0 0
    %951 = vmatmul.mubr.bf16.gmra.mrb[0].mxu0 %v913
    %v952 = vpop.f32.mrb[0].mxu0
    %v953 = vadd.f32 0.0, %v952
    %v954 = vpop.f32.mrb[0].mxu0
    %v955 = vpop.f32.mrb[0].mxu0
    %v956 = vpop.f32.mrb[0].mxu0
    %957 = vdwg.mxu0
    %958 = vrot.lane.b32.xlu0 %v156, 64
    %v959 = vpop.permute.xlu0 %958
    %v961 = vsel %vm161, %v667, 0
    %v964 = vsel %vm674, %v959, 0
    %966 = vmatprep.subr.bf16.mxu0 0
    %967 = vmatpush1.bf16.msra.mxu0 %v964
    %968 = vmatprep.subr.bf16.mxu0 0
    %969 = vmatpush1.bf16.msra.mxu0 0
    %970 = vmatprep.subr.bf16.mxu0 0
    %971 = vmatpush1.bf16.msra.mxu0 0
    %972 = vmatprep.subr.bf16.mxu0 0
    %973 = vmatpush1.bf16.msra.mxu0 0
    %974 = vmatprep.subr.bf16.mxu0 0
    %975 = vmatpush1.bf16.msra.mxu0 0
    %976 = vmatprep.subr.bf16.mxu0 0
    %977 = vmatpush1.bf16.msra.mxu0 0
    %978 = vmatprep.subr.bf16.mxu0 0
    %979 = vmatpush1.bf16.msra.mxu0 0
    %980 = vmatprep.subr.bf16.mxu0 0
    %981 = vmatpush1.bf16.msra.mxu0 0
    %982 = vmatprep.subr.bf16.mxu0 0
    %983 = vmatpush1.bf16.msra.mxu0 0
    %984 = vmatprep.subr.bf16.mxu0 0
    %985 = vmatpush1.bf16.msra.mxu0 0
    %986 = vmatprep.subr.bf16.mxu0 0
    %987 = vmatpush1.bf16.msra.mxu0 0
    %988 = vmatprep.subr.bf16.mxu0 0
    %989 = vmatpush1.bf16.msra.mxu0 0
    %990 = vmatprep.subr.bf16.mxu0 0
    %991 = vmatpush1.bf16.msra.mxu0 0
    %992 = vmatprep.subr.bf16.mxu0 0
    %993 = vmatpush1.bf16.msra.mxu0 0
    %994 = vmatprep.subr.bf16.mxu0 0
    %995 = vmatpush1.bf16.msra.mxu0 0
    %996 = vmatprep.subr.bf16.mxu0 0
    %997 = vmatpush1.bf16.msra.mxu0 0
    %998 = vmatprep.mubr.bf16.mxu0 0
    %999 = vmatmul.mubr.bf16.gmra.mrb[0].mxu0 %v961
    %v1000 = vpop.f32.mrb[0].mxu0
    %v1001 = vadd.f32 0.0, %v1000
    %v1002 = vpop.f32.mrb[0].mxu0
    %v1003 = vpop.f32.mrb[0].mxu0
    %v1004 = vpop.f32.mrb[0].mxu0
    %1005 = vdwg.mxu0
    %1006 = vrot.lane.b32.xlu0 %v157, 64
    %v1007 = vpop.permute.xlu0 %1006
    %v1009 = vsel %vm161, %v668, 0
    %v1012 = vsel %vm674, %v1007, 0
    %1014 = vmatprep.subr.bf16.mxu0 0
    %1015 = vmatpush1.bf16.msra.mxu0 %v1012
    %1016 = vmatprep.subr.bf16.mxu0 0
    %1017 = vmatpush1.bf16.msra.mxu0 0
    %1018 = vmatprep.subr.bf16.mxu0 0
    %1019 = vmatpush1.bf16.msra.mxu0 0
    %1020 = vmatprep.subr.bf16.mxu0 0
    %1021 = vmatpush1.bf16.msra.mxu0 0
    %1022 = vmatprep.subr.bf16.mxu0 0
    %1023 = vmatpush1.bf16.msra.mxu0 0
    %1024 = vmatprep.subr.bf16.mxu0 0
    %1025 = vmatpush1.bf16.msra.mxu0 0
    %1026 = vmatprep.subr.bf16.mxu0 0
    %1027 = vmatpush1.bf16.msra.mxu0 0
    %1028 = vmatprep.subr.bf16.mxu0 0
    %1029 = vmatpush1.bf16.msra.mxu0 0
    %1030 = vmatprep.subr.bf16.mxu0 0
    %1031 = vmatpush1.bf16.msra.mxu0 0
    %1032 = vmatprep.subr.bf16.mxu0 0
    %1033 = vmatpush1.bf16.msra.mxu0 0
    %1034 = vmatprep.subr.bf16.mxu0 0
    %1035 = vmatpush1.bf16.msra.mxu0 0
    %1036 = vmatprep.subr.bf16.mxu0 0
    %1037 = vmatpush1.bf16.msra.mxu0 0
    %1038 = vmatprep.subr.bf16.mxu0 0
    %1039 = vmatpush1.bf16.msra.mxu0 0
    %1040 = vmatprep.subr.bf16.mxu0 0
    %1041 = vmatpush1.bf16.msra.mxu0 0
    %1042 = vmatprep.subr.bf16.mxu0 0
    %1043 = vmatpush1.bf16.msra.mxu0 0
    %1044 = vmatprep.subr.bf16.mxu0 0
    %1045 = vmatpush1.bf16.msra.mxu0 0
    %1046 = vmatprep.mubr.bf16.mxu0 0
    %1047 = vmatmul.mubr.bf16.gmra.mrb[0].mxu0 %v1009
    %v1048 = vpop.f32.mrb[0].mxu0
    %v1049 = vadd.f32 0.0, %v1048
    %v1050 = vpop.f32.mrb[0].mxu0
    %v1051 = vpop.f32.mrb[0].mxu0
    %v1052 = vpop.f32.mrb[0].mxu0
    %1053 = vdwg.mxu0
    %1055 = vrot.lane.b32.xlu0 %v761, 8
    %v1056 = vpop.permute.xlu0 %1055
    %1059 = vrot.lane.b32.xlu0 %v809, 16
    %v1060 = vpop.permute.xlu0 %1059
    %1063 = vrot.lane.b32.xlu0 %v857, 24
    %v1064 = vpop.permute.xlu0 %1063
    %v1066 = vsel %vm161, %v713, %v1056
    %vm1067 = vcmask 130048
    %v1068 = vsel %vm1067, %v1066, %v1060
    %vm1069 = vcmask 195584
    %v1070 = vsel %vm1069, %v1068, %v1064
    %1072 = vrot.lane.b32.xlu0 %v953, 8
    %v1073 = vpop.permute.xlu0 %1072
    %1076 = vrot.lane.b32.xlu0 %v1001, 16
    %v1077 = vpop.permute.xlu0 %1076
    %1080 = vrot.lane.b32.xlu0 %v1049, 24
    %v1081 = vpop.permute.xlu0 %1080
    %v1083 = vsel %vm161, %v905, %v1073
    %v1084 = vsel %vm1067, %v1083, %v1077
    %v1085 = vsel %vm1069, %v1084, %v1081
    %v1086 = vld [vmem:[%s3] sm:$0xf]
    %v1087 = vld [vmem:[%s3 + $0x4] sm:$0xf]
    %v1088 = vld [vmem:[%s3 + $0x8] sm:$0xf]
    %v1089 = vld [vmem:[%s3 + $0xc] sm:$0xf]
    %v1090 = vld [vmem:[%s3 + $0x10] sm:$0xf]
    %v1091 = vld [vmem:[%s3 + $0x14] sm:$0xf]
    %v1092 = vld [vmem:[%s3 + $0x18] sm:$0xf]
    %v1093 = vld [vmem:[%s3 + $0x1c] sm:$0xf]
    %v1094 = vld [vmem:[%s3 + $0x20] sm:$0xf]
    %v1095 = vld [vmem:[%s3 + $0x24] sm:$0xf]
    %v1096 = vld [vmem:[%s3 + $0x28] sm:$0xf]
    %v1097 = vld [vmem:[%s3 + $0x2c] sm:$0xf]
    %v1098 = vld [vmem:[%s3 + $0x30] sm:$0xf]
    %v1099 = vld [vmem:[%s3 + $0x34] sm:$0xf]
    %v1100 = vld [vmem:[%s3 + $0x38] sm:$0xf]
    %v1101 = vld [vmem:[%s3 + $0x3c] sm:$0xf]
    %v1102 = vld [vmem:[%s3 + $0x40] sm:$0xf]
    %v1103 = vld [vmem:[%s3 + $0x44] sm:$0xf]
    %v1104 = vld [vmem:[%s3 + $0x48] sm:$0xf]
    %v1105 = vld [vmem:[%s3 + $0x4c] sm:$0xf]
    %v1106 = vpack.c.bf16 %v1085, %v1070
    %v1107 = vlaneseq
    %v1108 = vshrl.u32 %v1107, 7
    %v1109 = vsub.s32 5, %v1108
    %v1110 = vrot.slane %v24, %v1109
    %v1115 = vunpack.c.l.b16 %v1086
    %v1116 = vunpack.c.l.b16 %v1087
    %v1117 = vunpack.c.l.b16 %v1088
    %v1118 = vunpack.c.l.b16 %v1089
    %v1119 = vpack.c.b16 %v1116, %v1115
    %v1120 = vpack.c.b16 %v1118, %v1117
    %v1124 = vsel %vm25, %v1106, 0
    %1126 = vmatprep.subr.bf16.mxu0 0
    %1127 = vmatpush1.bf16.msra.mxu0 %v1119
    %1128 = vmatprep.subr.bf16.mxu0 0
    %1129 = vmatpush1.bf16.msra.mxu0 %v1120
    %1130 = vmatprep.subr.bf16.mxu0 0
    %1131 = vmatpush1.bf16.msra.mxu0 0
    %1132 = vmatprep.subr.bf16.mxu0 0
    %1133 = vmatpush1.bf16.msra.mxu0 0
    %1134 = vmatprep.subr.bf16.mxu0 0
    %1135 = vmatpush1.bf16.msra.mxu0 0
    %1136 = vmatprep.subr.bf16.mxu0 0
    %1137 = vmatpush1.bf16.msra.mxu0 0
    %1138 = vmatprep.subr.bf16.mxu0 0
    %1139 = vmatpush1.bf16.msra.mxu0 0
    %1140 = vmatprep.subr.bf16.mxu0 0
    %1141 = vmatpush1.bf16.msra.mxu0 0
    %1142 = vmatprep.subr.bf16.mxu0 0
    %1143 = vmatpush1.bf16.msra.mxu0 0
    %1144 = vmatprep.subr.bf16.mxu0 0
    %1145 = vmatpush1.bf16.msra.mxu0 0
    %1146 = vmatprep.subr.bf16.mxu0 0
    %1147 = vmatpush1.bf16.msra.mxu0 0
    %1148 = vmatprep.subr.bf16.mxu0 0
    %1149 = vmatpush1.bf16.msra.mxu0 0
    %1150 = vmatprep.subr.bf16.mxu0 0
    %1151 = vmatpush1.bf16.msra.mxu0 0
    %1152 = vmatprep.subr.bf16.mxu0 0
    %1153 = vmatpush1.bf16.msra.mxu0 0
    %1154 = vmatprep.subr.bf16.mxu0 0
    %1155 = vmatpush1.bf16.msra.mxu0 0
    %1156 = vmatprep.subr.bf16.mxu0 0
    %1157 = vmatpush1.bf16.msra.mxu0 0
    %1158 = vmatprep.mubr.bf16.mxu0 0
    %1159 = vmatmul.mubr.bf16.gmra.mrb[0].mxu0 %v1124
    %v1160 = vpop.f32.mrb[0].mxu0
    %v1161 = vadd.f32 %v1110, %v1160
    %v1162 = vpop.f32.mrb[0].mxu0
    %v1163 = vpop.f32.mrb[0].mxu0
    %v1164 = vadd.f32 %v1110, %v1163
    %v1165 = vpop.f32.mrb[0].mxu0
    %1166 = vdwg.mxu0
    %v1167 = vadd.f32 %v22, %v1161
    %v1168 = vadd.f32 %v23, %v1164
    %v1169 = vsel %vm25, %v1167, 0.0
    %1170 = vadd.xlane.f32.xlu0 %v1169
    %v1171 = vpop.xlane.xlu0 %1170
    %v1172 = vsel %vm25, %v1168, 0.0
    %1173 = vadd.xlane.f32.xlu0 %v1172
    %v1174 = vpop.xlane.xlu0 %1173
    %v1175 = vmul.f32 %v1171, %v32
    %v1176 = vmul.f32 %v1174, %v32
    %v1177 = vsub.f32 %v1167, %v1175
    %v1178 = vsub.f32 %v1168, %v1176
    %v1179 = vmul.f32 %v1177, %v1177
    %v1180 = vmul.f32 %v1178, %v1178
    %v1181 = vsel %vm25, %v1179, 0.0
    %1182 = vadd.xlane.f32.xlu0 %v1181
    %v1183 = vpop.xlane.xlu0 %1182
    %v1184 = vsel %vm25, %v1180, 0.0
    %1185 = vadd.xlane.f32.xlu0 %v1184
    %v1186 = vpop.xlane.xlu0 %1185
    %v1187 = vmul.f32 %v1183, %v32
    %v1188 = vmul.f32 %v1186, %v32
    %v1189 = vadd.f32 %v1187, 1e-05
    %v1190 = vadd.f32 %v1188, 1e-05
    %v1191 = vrsqrt.pop %v1189
    %v1192 = vrsqrt.pop %v1190
    %v1193 = vmul.f32 %v1177, %v1191
    %v1194 = vmul.f32 %v1178, %v1192
    %v1195 = vlaneseq
    %v1196 = vshrl.u32 %v1195, 7
    %v1197 = vsub.s32 2, %v1196
    %v1198 = vrot.slane %v24, %v1197
    %v1199 = vmul.f32 %v1193, %v1198
    %v1200 = vmul.f32 %v1194, %v1198
    %v1201 = vlaneseq
    %v1202 = vshrl.u32 %v1201, 7
    %v1203 = vsub.s32 3, %v1202
    %v1204 = vrot.slane %v24, %v1203
    %v1205 = vadd.f32 %v1199, %v1204
    %v1206 = vadd.f32 %v1200, %v1204
    %v1207 = vpack.c.bf16 %v1206, %v1205
    %v1208 = vld [vmem:[%s4] sm:$0xf]
    %v1209 = vld [vmem:[%s4 + $0x4] sm:$0xf]
    %v1210 = vld [vmem:[%s4 + $0x8] sm:$0xf]
    %v1211 = vld [vmem:[%s4 + $0xc] sm:$0xf]
    %v1212 = vlaneseq
    %v1213 = vshrl.u32 %v1212, 7
    %v1214 = vsub.s32 6, %v1213
    %v1215 = vrot.slane %v24, %v1214
    %v1220 = vunpack.c.l.b16 %v1208
    %v1221 = vunpack.c.l.b16 %v1209
    %v1222 = vunpack.c.l.b16 %v1210
    %v1223 = vunpack.c.l.b16 %v1211
    %v1224 = vpack.c.b16 %v1221, %v1220
    %v1225 = vpack.c.b16 %v1223, %v1222
    %v1229 = vsel %vm25, %v1207, 0
    %1231 = vmatprep.subr.bf16.mxu0 0
    %1232 = vmatpush1.bf16.msra.mxu0 %v1224
    %1233 = vmatprep.subr.bf16.mxu0 0
    %1234 = vmatpush1.bf16.msra.mxu0 %v1225
    %1235 = vmatprep.subr.bf16.mxu0 0
    %1236 = vmatpush1.bf16.msra.mxu0 0
    %1237 = vmatprep.subr.bf16.mxu0 0
    %1238 = vmatpush1.bf16.msra.mxu0 0
    %1239 = vmatprep.subr.bf16.mxu0 0
    %1240 = vmatpush1.bf16.msra.mxu0 0
    %1241 = vmatprep.subr.bf16.mxu0 0
    %1242 = vmatpush1.bf16.msra.mxu0 0
    %1243 = vmatprep.subr.bf16.mxu0 0
    %1244 = vmatpush1.bf16.msra.mxu0 0
    %1245 = vmatprep.subr.bf16.mxu0 0
    %1246 = vmatpush1.bf16.msra.mxu0 0
    %1247 = vmatprep.subr.bf16.mxu0 0
    %1248 = vmatpush1.bf16.msra.mxu0 0
    %1249 = vmatprep.subr.bf16.mxu0 0
    %1250 = vmatpush1.bf16.msra.mxu0 0
    %1251 = vmatprep.subr.bf16.mxu0 0
    %1252 = vmatpush1.bf16.msra.mxu0 0
    %1253 = vmatprep.subr.bf16.mxu0 0
    %1254 = vmatpush1.bf16.msra.mxu0 0
    %1255 = vmatprep.subr.bf16.mxu0 0
    %1256 = vmatpush1.bf16.msra.mxu0 0
    %1257 = vmatprep.subr.bf16.mxu0 0
    %1258 = vmatpush1.bf16.msra.mxu0 0
    %1259 = vmatprep.subr.bf16.mxu0 0
    %1260 = vmatpush1.bf16.msra.mxu0 0
    %1261 = vmatprep.subr.bf16.mxu0 0
    %1262 = vmatpush1.bf16.msra.mxu0 0
    %1263 = vmatprep.mubr.bf16.mxu0 0
    %1264 = vmatmul.mubr.bf16.gmra.mrb[0].mxu0 %v1229
    %v1265 = vpop.f32.mrb[0].mxu0
    %v1266 = vadd.f32 %v1215, %v1265
    %v1267 = vpop.f32.mrb[0].mxu0
    %v1268 = vpop.f32.mrb[0].mxu0
    %v1269 = vadd.f32 %v1215, %v1268
    %v1270 = vpop.f32.mrb[0].mxu0
    %1271 = vdwg.mxu0
    %v1272 = vmul.f32 %v1266, 0.5
    %v1273 = vmul.f32 %v1269, 0.5
    %v1274 = vmul.f32 %v1266, %v1266
    %v1275 = vmul.f32 %v1269, %v1269
    %v1276 = vmul.f32 %v1274, %v1266
    %v1277 = vmul.f32 %v1275, %v1269
    %v1278 = vmul.f32 %v1276, 0.044715
    %v1279 = vmul.f32 %v1277, 0.044715
    %v1280 = vadd.f32 %v1266, %v1278
    %v1281 = vadd.f32 %v1269, %v1279
    %v1282 = vmul.f32 %v1280, 0.7978846
    %v1283 = vmul.f32 %v1281, 0.7978846
    %v1284 = vtanh.pop %v1282
    %v1285 = vtanh.pop %v1283
    %v1286 = vadd.f32 %v1284, 1.0
    %v1287 = vadd.f32 %v1285, 1.0
    %v1288 = vmul.f32 %v1272, %v1286
    %v1289 = vmul.f32 %v1273, %v1287
    %v1290 = vpack.c.bf16 %v1289, %v1288
    %v1291 = vlaneseq
    %v1292 = vshrl.u32 %v1291, 7
    %v1293 = vsub.s32 7, %v1292
    %v1294 = vrot.slane %v24, %v1293
    %v1311 = vunpack.c.l.b16 %v1090
    %v1312 = vunpack.c.l.b16 %v1091
    %v1313 = vunpack.c.l.b16 %v1092
    %v1314 = vunpack.c.l.b16 %v1093
    %v1315 = vunpack.c.l.b16 %v1094
    %v1316 = vunpack.c.l.b16 %v1095
    %v1317 = vunpack.c.l.b16 %v1096
    %v1318 = vunpack.c.l.b16 %v1097
    %v1319 = vunpack.c.l.b16 %v1098
    %v1320 = vunpack.c.l.b16 %v1099
    %v1321 = vunpack.c.l.b16 %v1100
    %v1322 = vunpack.c.l.b16 %v1101
    %v1323 = vunpack.c.l.b16 %v1102
    %v1324 = vunpack.c.l.b16 %v1103
    %v1325 = vunpack.c.l.b16 %v1104
    %v1326 = vunpack.c.l.b16 %v1105
    %v1327 = vpack.c.b16 %v1312, %v1311
    %v1328 = vpack.c.b16 %v1314, %v1313
    %v1329 = vpack.c.b16 %v1316, %v1315
    %v1330 = vpack.c.b16 %v1318, %v1317
    %v1331 = vpack.c.b16 %v1320, %v1319
    %v1332 = vpack.c.b16 %v1322, %v1321
    %v1333 = vpack.c.b16 %v1324, %v1323
    %v1334 = vpack.c.b16 %v1326, %v1325
    %1343 = vmatprep.subr.bf16.mxu0 0
    %1344 = vmatpush1.bf16.msra.mxu0 %v1327
    %1345 = vmatprep.subr.bf16.mxu0 0
    %1346 = vmatpush1.bf16.msra.mxu0 %v1328
    %1347 = vmatprep.subr.bf16.mxu0 0
    %1348 = vmatpush1.bf16.msra.mxu0 %v1329
    %1349 = vmatprep.subr.bf16.mxu0 0
    %1350 = vmatpush1.bf16.msra.mxu0 %v1330
    %1351 = vmatprep.subr.bf16.mxu0 0
    %1352 = vmatpush1.bf16.msra.mxu0 %v1331
    %1353 = vmatprep.subr.bf16.mxu0 0
    %1354 = vmatpush1.bf16.msra.mxu0 %v1332
    %1355 = vmatprep.subr.bf16.mxu0 0
    %1356 = vmatpush1.bf16.msra.mxu0 %v1333
    %1357 = vmatprep.subr.bf16.mxu0 0
    %1358 = vmatpush1.bf16.msra.mxu0 %v1334
    %1359 = vmatprep.subr.bf16.mxu0 0
    %1360 = vmatpush1.bf16.msra.mxu0 0
    %1361 = vmatprep.subr.bf16.mxu0 0
    %1362 = vmatpush1.bf16.msra.mxu0 0
    %1363 = vmatprep.subr.bf16.mxu0 0
    %1364 = vmatpush1.bf16.msra.mxu0 0
    %1365 = vmatprep.subr.bf16.mxu0 0
    %1366 = vmatpush1.bf16.msra.mxu0 0
    %1367 = vmatprep.subr.bf16.mxu0 0
    %1368 = vmatpush1.bf16.msra.mxu0 0
    %1369 = vmatprep.subr.bf16.mxu0 0
    %1370 = vmatpush1.bf16.msra.mxu0 0
    %1371 = vmatprep.subr.bf16.mxu0 0
    %1372 = vmatpush1.bf16.msra.mxu0 0
    %1373 = vmatprep.subr.bf16.mxu0 0
    %1374 = vmatpush1.bf16.msra.mxu0 0
    %1375 = vmatprep.mubr.bf16.mxu0 0
    %1376 = vmatmul.mubr.bf16.gmra.mrb[0].mxu0 %v1290
    %v1377 = vpop.f32.mrb[0].mxu0
    %v1378 = vadd.f32 %v1294, %v1377
    %v1379 = vpop.f32.mrb[0].mxu0
    %v1380 = vpop.f32.mrb[0].mxu0
    %v1381 = vadd.f32 %v1294, %v1380
    %v1382 = vpop.f32.mrb[0].mxu0
    %1383 = vdwg.mxu0
    %v1384 = vadd.f32 %v1167, %v1378
    %v1385 = vadd.f32 %v1168, %v1381
    %1386 = vst.msk [vmem:[#allocation2] sm:$0xff] %vm25, %v1384
    %1387 = vst.msk [vmem:[#allocation2 + $0x8] sm:$0xff] %vm25, %v1385
    // Predicated region
    $region22: #{tpu_custom_call.1} parent=1 // pred_check
      _
    $region23: #{tpu_custom_call.1} parent=1 // pred_check_branch
      %1389 = sbr.rel (0) target = $region25
    $region24: #{tpu_custom_call.1} parent=1 // pred_region
      %s1391 = ssub.s32 256, 256
      %1392 = vsyncadd [#allocation3], %s1391
      %s1393 = sshll.u32 [#allocation2], 4
      %s1394 = int_to_ptr.vmem [resolvable:$true] %s1393
      %1399 = dma.vmem_to_hbm [thread:$0]  %s1394, 256, %s5, [#allocation3], 128, 128, 8
    $region25: #{tpu_custom_call.1} parent=1 // pred_fallthru
      _
    // Predicated region
    $region26: #{tpu_custom_call.1} parent=1 // pred_check
      _
    $region27: #{tpu_custom_call.1} parent=1 // pred_check_branch
      %1401 = sbr.rel (0) target = $region29
    $region28: #{tpu_custom_call.1} parent=1 // pred_region
      %1402 = dma.done [#allocation3], 256
    $region29: #{tpu_custom_call.1} parent=1 // pred_fallthru
      _
    %1403 = vsyncpa [#allocation3], 1

</llo_original>
